<compile_context>
chip_gen: v7x
topology: tpu7x:2x2x1
jax: 0.10.0
libtpu: 0.0.40
codegen_flags: <defaults>
</compile_context>

<pallas_src>
import functools
import math

import jax
import jax.numpy as jnp
from jax.experimental import pallas as pl
from jax.experimental.pallas import tpu as pltpu


def _lstm_kernel(xflat_ref, wx_ref, wh_ref, b_ref, hseq_ref, xproj_ref,
                 *, seq_len, batch, hidden):
    """Single-invocation LSTM over the whole sequence.

    xflat_ref: (S*B, I)  time-major flattened input (row t*B+b = x[b, t, :])
    wx_ref:    (I, 4H)   fused input->gates weights (i/f/o columns pre-halved)
    wh_ref:    (H, 4H)   fused hidden->gates weights (i/f/o columns pre-halved)
    b_ref:     (1, 4H)   fused bias (i/f/o entries pre-halved)
    hseq_ref:  (B, S*H)  lane-dense per-timestep hidden outputs
    xproj_ref: (S*B, 4H) VMEM scratch for the precomputed input projection
    """
    gates = 4 * hidden

    # Hoist the recurrent weight load out of the time loop.
    wh = wh_ref[...]                                            # (H, 4H)

    # --- non-recurrent work, off the serial critical path ------------------
    # One (S*B, I) @ (I, 4H) MXU call for every timestep's input projection,
    # with the bias folded in once.  Stored in VMEM scratch (not values) so the
    # fully unrolled loop doesn't hold 64 vregs of xproj live.
    xproj_ref[...] = (
        jnp.dot(xflat_ref[...], wx_ref[...], preferred_element_type=jnp.float32)
        + b_ref[...]
    )

    s = jnp.zeros((batch, hidden), jnp.float32)
    h = jnp.zeros((batch, hidden), jnp.float32)

    # --- serial recurrence: one dependent matmul + one tanh pass per step ---
    store_group = []        # up to 4 h_t (4*H = 128 lanes) per lane-dense store
    group_start = 0
    for t in range(seq_len):
        # Static slice of the precomputed projection (sublane-aligned: B = 64).
        z = xproj_ref[t * batch:(t + 1) * batch, :] + jnp.dot(
            h, wh, preferred_element_type=jnp.float32)          # (B, 4H)

        a = jnp.tanh(z)            # one full-vreg EUP pass covers all 4 gates
        sig = 0.5 * a + 0.5        # sigmoid(x) = 0.5*tanh(x/2)+0.5 (i/f/o pre-halved)

        g = a[:, 0:hidden]
        i = sig[:, hidden:2 * hidden]
        f = sig[:, 2 * hidden:3 * hidden]
        o = sig[:, 3 * hidden:4 * hidden]

        s = g * i + s * f
        h = jnp.tanh(s) * o

        # Lane-dense output: group 4 timesteps -> one unmasked 128-lane store.
        store_group.append(h.astype(hseq_ref.dtype))
        if len(store_group) == 4 or t == seq_len - 1:
            n = len(store_group)
            block = (jnp.concatenate(store_group, axis=1) if n > 1
                     else store_group[0])
            hseq_ref[:, group_start * hidden:(group_start + n) * hidden] = block
            group_start += n
            store_group = []


def lstm_forward(x, params):
    """x: (B, S, I) float32.  Returns (h_last (B,1,H), h_seq (B,S,H)),
    matching Lstm.forward's (h, stack(h_out, dim=1).squeeze())."""
    B, S, I = x.shape
    H = params["wg"].shape[1]
    G = 4 * H
    assert params["wg"].shape[0] == I + H

    # --- weight prep (plain JAX glue, done once per call) -------------------
    # Fuse the four concat-weights into (I+H, 4H) and split into x/h halves.
    w_full = jnp.concatenate(
        [params["wg"], params["wi"], params["wf"], params["wo"]], axis=1
    )  # (I+H, 4H)
    b_full = jnp.concatenate(
        [params["bg"], params["bi"], params["bf"], params["bo"]]
    )  # (4H,)
    # Fold sigmoid(x) = 0.5*tanh(x/2)+0.5 into the i/f/o pre-activations by
    # halving those weight/bias columns; the g gate stays at scale 1 (tanh).
    gate_scale = jnp.concatenate(
        [jnp.ones((H,), jnp.float32), jnp.full((3 * H,), 0.5, jnp.float32)]
    )  # (4H,)
    w_full = w_full * gate_scale[None, :]
    b_full = (b_full * gate_scale).reshape(1, G)
    wx = w_full[:I, :]   # (I, 4H)
    wh = w_full[I:, :]   # (H, 4H)

    # Time-major flatten so the kernel's input-projection matmul needs no
    # in-kernel reshape and per-step slices are plain sublane-aligned row blocks.
    x_flat = jnp.transpose(x, (1, 0, 2)).reshape(S * B, I)  # (S*B, I)

    kernel = functools.partial(_lstm_kernel, seq_len=S, batch=B, hidden=H)

    # Advisory cost hint: 2 matmuls worth of flops, tanh over (B,4H)+(B,H) per
    # step, and the HBM traffic for inputs/weights/output (all f32).
    cost = pl.CostEstimate(
        flops=2 * S * B * (I + H) * G,
        transcendentals=S * B * (G + H),
        bytes_accessed=4 * (S * B * I + (I + H) * G + G + B * S * H),
    )

    h_seq_flat = pl.pallas_call(
        kernel,
        out_shape=jax.ShapeDtypeStruct((B, S * H), x.dtype),
        grid=(1,),
        in_specs=[
            pl.BlockSpec((S * B, I), lambda i: (0, 0)),   # whole sequence in VMEM
            pl.BlockSpec((I, G), lambda i: (0, 0)),
            pl.BlockSpec((H, G), lambda i: (0, 0)),
            pl.BlockSpec((1, G), lambda i: (0, 0)),
        ],
        out_specs=pl.BlockSpec((B, S * H), lambda i: (0, 0)),  # lane-dense output
        scratch_shapes=[pltpu.VMEM((S * B, G), jnp.float32)],  # xproj scratch
        compiler_params=pltpu.CompilerParams(
            dimension_semantics=("arbitrary",),
        ),
        cost_estimate=cost,
    )(x_flat, wx, wh, b_full)

    h_seq = h_seq_flat.reshape(B, S, H)   # free row-major reshape
    h_last = h_seq[:, -1:, :]             # (B, 1, H) == self.h
    return h_last, h_seq


def init_params(key, input_size, hidden_size):
    """Deterministic Xavier-uniform weights (as in init_weights), zero biases."""
    C = input_size + hidden_size
    ks = jax.random.split(key, 4)
    bound = math.sqrt(6.0 / (C + hidden_size))
    u = lambda k: jax.random.uniform(k, (C, hidden_size), jnp.float32, -bound, bound)
    return {
        "wg": u(ks[0]), "wi": u(ks[1]), "wf": u(ks[2]), "wo": u(ks[3]),
        "bg": jnp.zeros((hidden_size,), jnp.float32),
        "bi": jnp.zeros((hidden_size,), jnp.float32),
        "bf": jnp.zeros((hidden_size,), jnp.float32),
        "bo": jnp.zeros((hidden_size,), jnp.float32),
    }


def lstm_reference(x, params):
    """Pure-JAX reference mirroring the PyTorch loop, for a correctness check."""
    B, S, I = x.shape
    H = params["wg"].shape[1]
    s = jnp.zeros((B, H), jnp.float32)
    h = jnp.zeros((B, H), jnp.float32)
    hs = []
    for t in range(S):
        xc = jnp.concatenate([x[:, t, :], h], axis=-1)
        g = jnp.tanh(xc @ params["wg"] + params["bg"])
        i = jax.nn.sigmoid(xc @ params["wi"] + params["bi"])
        f = jax.nn.sigmoid(xc @ params["wf"] + params["bf"])
        o = jax.nn.sigmoid(xc @ params["wo"] + params["bo"])
        s = g * i + s * f
        h = jnp.tanh(s) * o
        hs.append(h)
    h_seq = jnp.stack(hs, axis=1)
    return h[:, None, :], h_seq


if __name__ == "__main__":
    # Lstmcell hardcodes batch_size=64 for its state buffers, so the forward's
    # broadcasting only works with batch=64 — keep it faithful.
    B, S, I, H = 64, 8, 16, 32

    key = jax.random.PRNGKey(0)
    kx, kp = jax.random.split(key)
    x = jax.random.normal(kx, (B, S, I), jnp.float32)
    params = init_params(kp, I, H)

    h_last, h_seq = jax.block_until_ready(lstm_forward(x, params))

    h_last_ref, h_seq_ref = lstm_reference(x, params)
    assert h_last.shape == (B, 1, H) and h_seq.shape == (B, S, H)
    assert jnp.allclose(h_last, h_last_ref, atol=1e-5, rtol=1e-5)
    assert jnp.allclose(h_seq, h_seq_ref, atol=1e-5, rtol=1e-5)

    print("KERNEL_OK")
</pallas_src>

<mosaic_0001>
module attributes {stable_mosaic.version = 11 : i64} {
  func.func @_lstm_kernel(%arg0: i32, %arg1: memref<512x16xf32, #tpu.memory_space<vmem>>, %arg2: memref<16x128xf32, #tpu.memory_space<vmem>>, %arg3: memref<32x128xf32, #tpu.memory_space<vmem>>, %arg4: memref<1x128xf32, #tpu.memory_space<vmem>>, %arg5: memref<64x256xf32, #tpu.memory_space<vmem>>, %arg6: memref<512x128xf32, #tpu.memory_space<vmem>>) attributes {dimension_semantics = [#tpu.dimension_semantics<arbitrary>], iteration_bounds = array<i64: 1>, scalar_prefetch = 0 : i64, scratch_operands = 1 : i64, tpu.core_type = #tpu.core_type<tc>, window_params = [{pipeline_mode = #tpu.pipeline_mode<synchronous>, transform_indices = @transform_0, window_bounds = array<i64: 512, 16>}, {pipeline_mode = #tpu.pipeline_mode<synchronous>, transform_indices = @transform_1, window_bounds = array<i64: 16, 128>}, {pipeline_mode = #tpu.pipeline_mode<synchronous>, transform_indices = @transform_2, window_bounds = array<i64: 32, 128>}, {pipeline_mode = #tpu.pipeline_mode<synchronous>, transform_indices = @transform_3, window_bounds = array<i64: 1, 128>}, {pipeline_mode = #tpu.pipeline_mode<synchronous>, transform_indices = @transform_4, window_bounds = array<i64: 64, 256>}]} {
    %c0 = arith.constant 0 : index
    %c0_0 = arith.constant 0 : index
    %0 = vector.load %arg3[%c0, %c0_0] : memref<32x128xf32, #tpu.memory_space<vmem>>, vector<32x128xf32>
    %c0_1 = arith.constant 0 : index
    %c0_2 = arith.constant 0 : index
    %1 = vector.load %arg1[%c0_1, %c0_2] : memref<512x16xf32, #tpu.memory_space<vmem>>, vector<512x16xf32>
    %c0_3 = arith.constant 0 : index
    %c0_4 = arith.constant 0 : index
    %2 = vector.load %arg2[%c0_3, %c0_4] : memref<16x128xf32, #tpu.memory_space<vmem>>, vector<16x128xf32>
    %cst = arith.constant dense<0.000000e+00> : vector<512x128xf32>
    %3 = tpu.matmul %1, %2, %cst {dimension_numbers = #tpu.dot_dimension_numbers<[1], [0], [0], [1], [0, 0, 1, 1], [], []>} : vector<512x16xf32>, vector<16x128xf32>, vector<512x128xf32> -> vector<512x128xf32>
    %c0_5 = arith.constant 0 : index
    %c0_6 = arith.constant 0 : index
    %4 = vector.load %arg4[%c0_5, %c0_6] : memref<1x128xf32, #tpu.memory_space<vmem>>, vector<1x128xf32>
    %5 = vector.broadcast %4 : vector<1x128xf32> to vector<512x128xf32>
    %6 = arith.addf %3, %5 : vector<512x128xf32>
    %c0_7 = arith.constant 0 : index
    %c0_8 = arith.constant 0 : index
    %7 = vector.load %arg6[%c0_7, %c0_8] : memref<512x128xf32, #tpu.memory_space<vmem>>, vector<512x128xf32>
    tpu.vector_store %arg6[%c0_7, %c0_8], %6 {strides = array<i32>} : memref<512x128xf32, #tpu.memory_space<vmem>>, vector<512x128xf32>,
    %cst_9 = arith.constant 0.000000e+00 : f32
    %8 = vector.broadcast %cst_9 : f32 to vector<64x32xf32>
    %cst_10 = arith.constant 0.000000e+00 : f32
    %9 = vector.broadcast %cst_10 : f32 to vector<64x32xf32>
    %c0_11 = arith.constant 0 : index
    %c0_12 = arith.constant 0 : index
    %10 = vector.load %arg6[%c0_11, %c0_12] : memref<512x128xf32, #tpu.memory_space<vmem>>, vector<64x128xf32>
    %cst_13 = arith.constant dense<0.000000e+00> : vector<64x128xf32>
    %11 = tpu.matmul %9, %0, %cst_13 {dimension_numbers = #tpu.dot_dimension_numbers<[1], [0], [0], [1], [0, 0, 1, 1], [], []>} : vector<64x32xf32>, vector<32x128xf32>, vector<64x128xf32> -> vector<64x128xf32>
    %12 = arith.addf %10, %11 : vector<64x128xf32>
    %13 = math.tanh %12 : vector<64x128xf32>
    %cst_14 = arith.constant 5.000000e-01 : f32
    %14 = vector.broadcast %cst_14 : f32 to vector<64x128xf32>
    %15 = arith.mulf %14, %13 : vector<64x128xf32>
    %cst_15 = arith.constant 5.000000e-01 : f32
    %16 = vector.broadcast %cst_15 : f32 to vector<64x128xf32>
    %17 = arith.addf %15, %16 : vector<64x128xf32>
    %18 = vector.extract_strided_slice %13 {offsets = [0, 0], sizes = [64, 32], strides = [1, 1]} : vector<64x128xf32> to vector<64x32xf32>
    %19 = vector.extract_strided_slice %17 {offsets = [0, 32], sizes = [64, 32], strides = [1, 1]} : vector<64x128xf32> to vector<64x32xf32>
    %20 = vector.extract_strided_slice %17 {offsets = [0, 64], sizes = [64, 32], strides = [1, 1]} : vector<64x128xf32> to vector<64x32xf32>
    %21 = vector.extract_strided_slice %17 {offsets = [0, 96], sizes = [64, 32], strides = [1, 1]} : vector<64x128xf32> to vector<64x32xf32>
    %22 = arith.mulf %18, %19 : vector<64x32xf32>
    %23 = arith.mulf %8, %20 : vector<64x32xf32>
    %24 = arith.addf %22, %23 : vector<64x32xf32>
    %25 = math.tanh %24 : vector<64x32xf32>
    %26 = arith.mulf %25, %21 : vector<64x32xf32>
    %c64 = arith.constant 64 : index
    %c0_16 = arith.constant 0 : index
    %27 = vector.load %arg6[%c64, %c0_16] : memref<512x128xf32, #tpu.memory_space<vmem>>, vector<64x128xf32>
    %cst_17 = arith.constant dense<0.000000e+00> : vector<64x128xf32>
    %28 = tpu.matmul %26, %0, %cst_17 {dimension_numbers = #tpu.dot_dimension_numbers<[1], [0], [0], [1], [0, 0, 1, 1], [], []>} : vector<64x32xf32>, vector<32x128xf32>, vector<64x128xf32> -> vector<64x128xf32>
    %29 = arith.addf %27, %28 : vector<64x128xf32>
    %30 = math.tanh %29 : vector<64x128xf32>
    %cst_18 = arith.constant 5.000000e-01 : f32
    %31 = vector.broadcast %cst_18 : f32 to vector<64x128xf32>
    %32 = arith.mulf %31, %30 : vector<64x128xf32>
    %cst_19 = arith.constant 5.000000e-01 : f32
    %33 = vector.broadcast %cst_19 : f32 to vector<64x128xf32>
    %34 = arith.addf %32, %33 : vector<64x128xf32>
    %35 = vector.extract_strided_slice %30 {offsets = [0, 0], sizes = [64, 32], strides = [1, 1]} : vector<64x128xf32> to vector<64x32xf32>
    %36 = vector.extract_strided_slice %34 {offsets = [0, 32], sizes = [64, 32], strides = [1, 1]} : vector<64x128xf32> to vector<64x32xf32>
    %37 = vector.extract_strided_slice %34 {offsets = [0, 64], sizes = [64, 32], strides = [1, 1]} : vector<64x128xf32> to vector<64x32xf32>
    %38 = vector.extract_strided_slice %34 {offsets = [0, 96], sizes = [64, 32], strides = [1, 1]} : vector<64x128xf32> to vector<64x32xf32>
    %39 = arith.mulf %35, %36 : vector<64x32xf32>
    %40 = arith.mulf %24, %37 : vector<64x32xf32>
    %41 = arith.addf %39, %40 : vector<64x32xf32>
    %42 = math.tanh %41 : vector<64x32xf32>
    %43 = arith.mulf %42, %38 : vector<64x32xf32>
    %c128 = arith.constant 128 : index
    %c0_20 = arith.constant 0 : index
    %44 = vector.load %arg6[%c128, %c0_20] : memref<512x128xf32, #tpu.memory_space<vmem>>, vector<64x128xf32>
    %cst_21 = arith.constant dense<0.000000e+00> : vector<64x128xf32>
    %45 = tpu.matmul %43, %0, %cst_21 {dimension_numbers = #tpu.dot_dimension_numbers<[1], [0], [0], [1], [0, 0, 1, 1], [], []>} : vector<64x32xf32>, vector<32x128xf32>, vector<64x128xf32> -> vector<64x128xf32>
    %46 = arith.addf %44, %45 : vector<64x128xf32>
    %47 = math.tanh %46 : vector<64x128xf32>
    %cst_22 = arith.constant 5.000000e-01 : f32
    %48 = vector.broadcast %cst_22 : f32 to vector<64x128xf32>
    %49 = arith.mulf %48, %47 : vector<64x128xf32>
    %cst_23 = arith.constant 5.000000e-01 : f32
    %50 = vector.broadcast %cst_23 : f32 to vector<64x128xf32>
    %51 = arith.addf %49, %50 : vector<64x128xf32>
    %52 = vector.extract_strided_slice %47 {offsets = [0, 0], sizes = [64, 32], strides = [1, 1]} : vector<64x128xf32> to vector<64x32xf32>
    %53 = vector.extract_strided_slice %51 {offsets = [0, 32], sizes = [64, 32], strides = [1, 1]} : vector<64x128xf32> to vector<64x32xf32>
    %54 = vector.extract_strided_slice %51 {offsets = [0, 64], sizes = [64, 32], strides = [1, 1]} : vector<64x128xf32> to vector<64x32xf32>
    %55 = vector.extract_strided_slice %51 {offsets = [0, 96], sizes = [64, 32], strides = [1, 1]} : vector<64x128xf32> to vector<64x32xf32>
    %56 = arith.mulf %52, %53 : vector<64x32xf32>
    %57 = arith.mulf %41, %54 : vector<64x32xf32>
    %58 = arith.addf %56, %57 : vector<64x32xf32>
    %59 = math.tanh %58 : vector<64x32xf32>
    %60 = arith.mulf %59, %55 : vector<64x32xf32>
    %c192 = arith.constant 192 : index
    %c0_24 = arith.constant 0 : index
    %61 = vector.load %arg6[%c192, %c0_24] : memref<512x128xf32, #tpu.memory_space<vmem>>, vector<64x128xf32>
    %cst_25 = arith.constant dense<0.000000e+00> : vector<64x128xf32>
    %62 = tpu.matmul %60, %0, %cst_25 {dimension_numbers = #tpu.dot_dimension_numbers<[1], [0], [0], [1], [0, 0, 1, 1], [], []>} : vector<64x32xf32>, vector<32x128xf32>, vector<64x128xf32> -> vector<64x128xf32>
    %63 = arith.addf %61, %62 : vector<64x128xf32>
    %64 = math.tanh %63 : vector<64x128xf32>
    %cst_26 = arith.constant 5.000000e-01 : f32
    %65 = vector.broadcast %cst_26 : f32 to vector<64x128xf32>
    %66 = arith.mulf %65, %64 : vector<64x128xf32>
    %cst_27 = arith.constant 5.000000e-01 : f32
    %67 = vector.broadcast %cst_27 : f32 to vector<64x128xf32>
    %68 = arith.addf %66, %67 : vector<64x128xf32>
    %69 = vector.extract_strided_slice %64 {offsets = [0, 0], sizes = [64, 32], strides = [1, 1]} : vector<64x128xf32> to vector<64x32xf32>
    %70 = vector.extract_strided_slice %68 {offsets = [0, 32], sizes = [64, 32], strides = [1, 1]} : vector<64x128xf32> to vector<64x32xf32>
    %71 = vector.extract_strided_slice %68 {offsets = [0, 64], sizes = [64, 32], strides = [1, 1]} : vector<64x128xf32> to vector<64x32xf32>
    %72 = vector.extract_strided_slice %68 {offsets = [0, 96], sizes = [64, 32], strides = [1, 1]} : vector<64x128xf32> to vector<64x32xf32>
    %73 = arith.mulf %69, %70 : vector<64x32xf32>
    %74 = arith.mulf %58, %71 : vector<64x32xf32>
    %75 = arith.addf %73, %74 : vector<64x32xf32>
    %76 = math.tanh %75 : vector<64x32xf32>
    %77 = arith.mulf %76, %72 : vector<64x32xf32>
    %78 = tpu.concatenate %26, %43, %60, %77 in 1 : vector<64x32xf32>, vector<64x32xf32>, vector<64x32xf32>, vector<64x32xf32> -> vector<64x128xf32>
    %c0_28 = arith.constant 0 : index
    %c0_29 = arith.constant 0 : index
    %79 = vector.load %arg5[%c0_28, %c0_29] : memref<64x256xf32, #tpu.memory_space<vmem>>, vector<64x128xf32>
    tpu.vector_store %arg5[%c0_28, %c0_29], %78 {strides = array<i32>} : memref<64x256xf32, #tpu.memory_space<vmem>>, vector<64x128xf32>,
    %c256 = arith.constant 256 : index
    %c0_30 = arith.constant 0 : index
    %80 = vector.load %arg6[%c256, %c0_30] : memref<512x128xf32, #tpu.memory_space<vmem>>, vector<64x128xf32>
    %cst_31 = arith.constant dense<0.000000e+00> : vector<64x128xf32>
    %81 = tpu.matmul %77, %0, %cst_31 {dimension_numbers = #tpu.dot_dimension_numbers<[1], [0], [0], [1], [0, 0, 1, 1], [], []>} : vector<64x32xf32>, vector<32x128xf32>, vector<64x128xf32> -> vector<64x128xf32>
    %82 = arith.addf %80, %81 : vector<64x128xf32>
    %83 = math.tanh %82 : vector<64x128xf32>
    %cst_32 = arith.constant 5.000000e-01 : f32
    %84 = vector.broadcast %cst_32 : f32 to vector<64x128xf32>
    %85 = arith.mulf %84, %83 : vector<64x128xf32>
    %cst_33 = arith.constant 5.000000e-01 : f32
    %86 = vector.broadcast %cst_33 : f32 to vector<64x128xf32>
    %87 = arith.addf %85, %86 : vector<64x128xf32>
    %88 = vector.extract_strided_slice %83 {offsets = [0, 0], sizes = [64, 32], strides = [1, 1]} : vector<64x128xf32> to vector<64x32xf32>
    %89 = vector.extract_strided_slice %87 {offsets = [0, 32], sizes = [64, 32], strides = [1, 1]} : vector<64x128xf32> to vector<64x32xf32>
    %90 = vector.extract_strided_slice %87 {offsets = [0, 64], sizes = [64, 32], strides = [1, 1]} : vector<64x128xf32> to vector<64x32xf32>
    %91 = vector.extract_strided_slice %87 {offsets = [0, 96], sizes = [64, 32], strides = [1, 1]} : vector<64x128xf32> to vector<64x32xf32>
    %92 = arith.mulf %88, %89 : vector<64x32xf32>
    %93 = arith.mulf %75, %90 : vector<64x32xf32>
    %94 = arith.addf %92, %93 : vector<64x32xf32>
    %95 = math.tanh %94 : vector<64x32xf32>
    %96 = arith.mulf %95, %91 : vector<64x32xf32>
    %c320 = arith.constant 320 : index
    %c0_34 = arith.constant 0 : index
    %97 = vector.load %arg6[%c320, %c0_34] : memref<512x128xf32, #tpu.memory_space<vmem>>, vector<64x128xf32>
    %cst_35 = arith.constant dense<0.000000e+00> : vector<64x128xf32>
    %98 = tpu.matmul %96, %0, %cst_35 {dimension_numbers = #tpu.dot_dimension_numbers<[1], [0], [0], [1], [0, 0, 1, 1], [], []>} : vector<64x32xf32>, vector<32x128xf32>, vector<64x128xf32> -> vector<64x128xf32>
    %99 = arith.addf %97, %98 : vector<64x128xf32>
    %100 = math.tanh %99 : vector<64x128xf32>
    %cst_36 = arith.constant 5.000000e-01 : f32
    %101 = vector.broadcast %cst_36 : f32 to vector<64x128xf32>
    %102 = arith.mulf %101, %100 : vector<64x128xf32>
    %cst_37 = arith.constant 5.000000e-01 : f32
    %103 = vector.broadcast %cst_37 : f32 to vector<64x128xf32>
    %104 = arith.addf %102, %103 : vector<64x128xf32>
    %105 = vector.extract_strided_slice %100 {offsets = [0, 0], sizes = [64, 32], strides = [1, 1]} : vector<64x128xf32> to vector<64x32xf32>
    %106 = vector.extract_strided_slice %104 {offsets = [0, 32], sizes = [64, 32], strides = [1, 1]} : vector<64x128xf32> to vector<64x32xf32>
    %107 = vector.extract_strided_slice %104 {offsets = [0, 64], sizes = [64, 32], strides = [1, 1]} : vector<64x128xf32> to vector<64x32xf32>
    %108 = vector.extract_strided_slice %104 {offsets = [0, 96], sizes = [64, 32], strides = [1, 1]} : vector<64x128xf32> to vector<64x32xf32>
    %109 = arith.mulf %105, %106 : vector<64x32xf32>
    %110 = arith.mulf %94, %107 : vector<64x32xf32>
    %111 = arith.addf %109, %110 : vector<64x32xf32>
    %112 = math.tanh %111 : vector<64x32xf32>
    %113 = arith.mulf %112, %108 : vector<64x32xf32>
    %c384 = arith.constant 384 : index
    %c0_38 = arith.constant 0 : index
    %114 = vector.load %arg6[%c384, %c0_38] : memref<512x128xf32, #tpu.memory_space<vmem>>, vector<64x128xf32>
    %cst_39 = arith.constant dense<0.000000e+00> : vector<64x128xf32>
    %115 = tpu.matmul %113, %0, %cst_39 {dimension_numbers = #tpu.dot_dimension_numbers<[1], [0], [0], [1], [0, 0, 1, 1], [], []>} : vector<64x32xf32>, vector<32x128xf32>, vector<64x128xf32> -> vector<64x128xf32>
    %116 = arith.addf %114, %115 : vector<64x128xf32>
    %117 = math.tanh %116 : vector<64x128xf32>
    %cst_40 = arith.constant 5.000000e-01 : f32
    %118 = vector.broadcast %cst_40 : f32 to vector<64x128xf32>
    %119 = arith.mulf %118, %117 : vector<64x128xf32>
    %cst_41 = arith.constant 5.000000e-01 : f32
    %120 = vector.broadcast %cst_41 : f32 to vector<64x128xf32>
    %121 = arith.addf %119, %120 : vector<64x128xf32>
    %122 = vector.extract_strided_slice %117 {offsets = [0, 0], sizes = [64, 32], strides = [1, 1]} : vector<64x128xf32> to vector<64x32xf32>
    %123 = vector.extract_strided_slice %121 {offsets = [0, 32], sizes = [64, 32], strides = [1, 1]} : vector<64x128xf32> to vector<64x32xf32>
    %124 = vector.extract_strided_slice %121 {offsets = [0, 64], sizes = [64, 32], strides = [1, 1]} : vector<64x128xf32> to vector<64x32xf32>
    %125 = vector.extract_strided_slice %121 {offsets = [0, 96], sizes = [64, 32], strides = [1, 1]} : vector<64x128xf32> to vector<64x32xf32>
    %126 = arith.mulf %122, %123 : vector<64x32xf32>
    %127 = arith.mulf %111, %124 : vector<64x32xf32>
    %128 = arith.addf %126, %127 : vector<64x32xf32>
    %129 = math.tanh %128 : vector<64x32xf32>
    %130 = arith.mulf %129, %125 : vector<64x32xf32>
    %c448 = arith.constant 448 : index
    %c0_42 = arith.constant 0 : index
    %131 = vector.load %arg6[%c448, %c0_42] : memref<512x128xf32, #tpu.memory_space<vmem>>, vector<64x128xf32>
    %cst_43 = arith.constant dense<0.000000e+00> : vector<64x128xf32>
    %132 = tpu.matmul %130, %0, %cst_43 {dimension_numbers = #tpu.dot_dimension_numbers<[1], [0], [0], [1], [0, 0, 1, 1], [], []>} : vector<64x32xf32>, vector<32x128xf32>, vector<64x128xf32> -> vector<64x128xf32>
    %133 = arith.addf %131, %132 : vector<64x128xf32>
    %134 = math.tanh %133 : vector<64x128xf32>
    %cst_44 = arith.constant 5.000000e-01 : f32
    %135 = vector.broadcast %cst_44 : f32 to vector<64x128xf32>
    %136 = arith.mulf %135, %134 : vector<64x128xf32>
    %cst_45 = arith.constant 5.000000e-01 : f32
    %137 = vector.broadcast %cst_45 : f32 to vector<64x128xf32>
    %138 = arith.addf %136, %137 : vector<64x128xf32>
    %139 = vector.extract_strided_slice %134 {offsets = [0, 0], sizes = [64, 32], strides = [1, 1]} : vector<64x128xf32> to vector<64x32xf32>
    %140 = vector.extract_strided_slice %138 {offsets = [0, 32], sizes = [64, 32], strides = [1, 1]} : vector<64x128xf32> to vector<64x32xf32>
    %141 = vector.extract_strided_slice %138 {offsets = [0, 64], sizes = [64, 32], strides = [1, 1]} : vector<64x128xf32> to vector<64x32xf32>
    %142 = vector.extract_strided_slice %138 {offsets = [0, 96], sizes = [64, 32], strides = [1, 1]} : vector<64x128xf32> to vector<64x32xf32>
    %143 = arith.mulf %139, %140 : vector<64x32xf32>
    %144 = arith.mulf %128, %141 : vector<64x32xf32>
    %145 = arith.addf %143, %144 : vector<64x32xf32>
    %146 = math.tanh %145 : vector<64x32xf32>
    %147 = arith.mulf %146, %142 : vector<64x32xf32>
    %148 = tpu.concatenate %96, %113, %130, %147 in 1 : vector<64x32xf32>, vector<64x32xf32>, vector<64x32xf32>, vector<64x32xf32> -> vector<64x128xf32>
    %c0_46 = arith.constant 0 : index
    %c128_47 = arith.constant 128 : index
    %149 = vector.load %arg5[%c0_46, %c128_47] : memref<64x256xf32, #tpu.memory_space<vmem>>, vector<64x128xf32>
    tpu.vector_store %arg5[%c0_46, %c128_47], %148 {strides = array<i32>} : memref<64x256xf32, #tpu.memory_space<vmem>>, vector<64x128xf32>,
    return
  }
  func.func @transform_0(%arg0: i32) -> (i32, i32) {
    %c0_i32 = arith.constant 0 : i32
    %c0_i32_0 = arith.constant 0 : i32
    %c0_i32_1 = arith.constant 0 : i32
    return %c0_i32, %c0_i32_0 : i32, i32
  }
  func.func @transform_1(%arg0: i32) -> (i32, i32) {
    %c0_i32 = arith.constant 0 : i32
    %c0_i32_0 = arith.constant 0 : i32
    %c0_i32_1 = arith.constant 0 : i32
    return %c0_i32, %c0_i32_0 : i32, i32
  }
  func.func @transform_2(%arg0: i32) -> (i32, i32) {
    %c0_i32 = arith.constant 0 : i32
    %c0_i32_0 = arith.constant 0 : i32
    %c0_i32_1 = arith.constant 0 : i32
    return %c0_i32, %c0_i32_0 : i32, i32
  }
  func.func @transform_3(%arg0: i32) -> (i32, i32) {
    %c0_i32 = arith.constant 0 : i32
    %c0_i32_0 = arith.constant 0 : i32
    %c0_i32_1 = arith.constant 0 : i32
    return %c0_i32, %c0_i32_0 : i32, i32
  }
  func.func @transform_4(%arg0: i32) -> (i32, i32) {
    %c0_i32 = arith.constant 0 : i32
    %c0_i32_0 = arith.constant 0 : i32
    %c0_i32_1 = arith.constant 0 : i32
    return %c0_i32, %c0_i32_0 : i32, i32
  }
}

</mosaic_0001>

<llo_original>
// kernel: tpu_custom_call.1
$region0: #{tpu_custom_call.1}
  #allocation0 [shape = 'u32[]', space=smem, size = 0x4, offset = 0x4, fixed_abs, tag = 'smem constant byte address 0x4 - core index']
  #allocation1 [shape = 'u32[144,128]{1,0:T(1,128)}', space=vmem, size = 0x12000, scoped, tag = 'internal scratch']
  #allocation2 [shape = 'f32[512,128]{1,0:T(8,128)}', space=vmem, size = 0x40000, scoped, tag = 'scratch operand']
  %s0 = inlined_call_operand.vmem [shape: f32[512,16], index: 0, kind: input, shape index: {}]
  %s1 = inlined_call_operand.vmem [shape: f32[16,128], index: 1, kind: input, shape index: {}]
  %s2 = inlined_call_operand.vmem [shape: f32[32,128], index: 2, kind: input, shape index: {}]
  %s3 = inlined_call_operand.vmem [shape: f32[1,128], index: 3, kind: input, shape index: {}]
  %s4 = inlined_call_operand.hbm [shape: f32[64,256], index: 4, kind: output, shape index: {}]
  %s5 = sld [smem:[#allocation0]]
  $region26: #{tpu_custom_call.1} parent=0
    _
  %s7 = ssub.s32 1, %s5
  %s8 = scalar_select 0, %s7, %s5
  $region1: #{tpu_custom_call.1} parent=0
    #allocation3 [shape = 'u8[65536]{0}', space=vmem, size = 0x10000, scoped, tag = 'output window, operand 0, single buffered']
    #allocation4 [shape = 's32[1]{0}', space=sflag, size = 0x4, scoped, tag = 'scoped memory for tpu_custom_call.1']
    %9 = vsyncpa [#allocation4], 0
    // Predicated region
    $region2: #{tpu_custom_call.1} parent=1 // pred_check
      _
    $region3: #{tpu_custom_call.1} parent=1 // pred_check_branch
      %11 = sbr.rel (0) target = $region5
    $region4: #{tpu_custom_call.1} parent=1 // pred_region
      _
    $region5: #{tpu_custom_call.1} parent=1 // pred_fallthru
      _
    // Predicated region
    $region6: #{tpu_custom_call.1} parent=1 // pred_check
      _
    $region7: #{tpu_custom_call.1} parent=1 // pred_check_branch
      %13 = sbr.rel (0) target = $region9
    $region8: #{tpu_custom_call.1} parent=1 // pred_region
      _
    $region9: #{tpu_custom_call.1} parent=1 // pred_fallthru
      _
    // Predicated region
    $region10: #{tpu_custom_call.1} parent=1 // pred_check
      _
    $region11: #{tpu_custom_call.1} parent=1 // pred_check_branch
      %15 = sbr.rel (0) target = $region13
    $region12: #{tpu_custom_call.1} parent=1 // pred_region
      _
    $region13: #{tpu_custom_call.1} parent=1 // pred_fallthru
      _
    // Predicated region
    $region14: #{tpu_custom_call.1} parent=1 // pred_check
      _
    $region15: #{tpu_custom_call.1} parent=1 // pred_check_branch
      %17 = sbr.rel (0) target = $region17
    $region16: #{tpu_custom_call.1} parent=1 // pred_region
      _
    $region17: #{tpu_custom_call.1} parent=1 // pred_fallthru
      _
    %v18 = vld [vmem:[%s2] sm:$0xff]
    %v19 = vld [vmem:[%s2 + $0x8] sm:$0xff]
    %v20 = vld [vmem:[%s2 + $0x10] sm:$0xff]
    %v21 = vld [vmem:[%s2 + $0x18] sm:$0xff]
    %v22 = vld [vmem:[%s0] sm:$0xff]
    %v23 = vld [vmem:[%s0 + $0x8] sm:$0xff]
    %v24 = vld [vmem:[%s0 + $0x10] sm:$0xff]
    %v25 = vld [vmem:[%s0 + $0x18] sm:$0xff]
    %v26 = vld [vmem:[%s0 + $0x20] sm:$0xff]
    %v27 = vld [vmem:[%s0 + $0x28] sm:$0xff]
    %v28 = vld [vmem:[%s0 + $0x30] sm:$0xff]
    %v29 = vld [vmem:[%s0 + $0x38] sm:$0xff]
    %v30 = vld [vmem:[%s0 + $0x40] sm:$0xff]
    %v31 = vld [vmem:[%s0 + $0x48] sm:$0xff]
    %v32 = vld [vmem:[%s0 + $0x50] sm:$0xff]
    %v33 = vld [vmem:[%s0 + $0x58] sm:$0xff]
    %v34 = vld [vmem:[%s0 + $0x60] sm:$0xff]
    %v35 = vld [vmem:[%s0 + $0x68] sm:$0xff]
    %v36 = vld [vmem:[%s0 + $0x70] sm:$0xff]
    %v37 = vld [vmem:[%s0 + $0x78] sm:$0xff]
    %v38 = vld [vmem:[%s0 + $0x80] sm:$0xff]
    %v39 = vld [vmem:[%s0 + $0x88] sm:$0xff]
    %v40 = vld [vmem:[%s0 + $0x90] sm:$0xff]
    %v41 = vld [vmem:[%s0 + $0x98] sm:$0xff]
    %v42 = vld [vmem:[%s0 + $0xa0] sm:$0xff]
    %v43 = vld [vmem:[%s0 + $0xa8] sm:$0xff]
    %v44 = vld [vmem:[%s0 + $0xb0] sm:$0xff]
    %v45 = vld [vmem:[%s0 + $0xb8] sm:$0xff]
    %v46 = vld [vmem:[%s0 + $0xc0] sm:$0xff]
    %v47 = vld [vmem:[%s0 + $0xc8] sm:$0xff]
    %v48 = vld [vmem:[%s0 + $0xd0] sm:$0xff]
    %v49 = vld [vmem:[%s0 + $0xd8] sm:$0xff]
    %v50 = vld [vmem:[%s0 + $0xe0] sm:$0xff]
    %v51 = vld [vmem:[%s0 + $0xe8] sm:$0xff]
    %v52 = vld [vmem:[%s0 + $0xf0] sm:$0xff]
    %v53 = vld [vmem:[%s0 + $0xf8] sm:$0xff]
    %v54 = vld [vmem:[%s0 + $0x100] sm:$0xff]
    %v55 = vld [vmem:[%s0 + $0x108] sm:$0xff]
    %v56 = vld [vmem:[%s0 + $0x110] sm:$0xff]
    %v57 = vld [vmem:[%s0 + $0x118] sm:$0xff]
    %v58 = vld [vmem:[%s0 + $0x120] sm:$0xff]
    %v59 = vld [vmem:[%s0 + $0x128] sm:$0xff]
    %v60 = vld [vmem:[%s0 + $0x130] sm:$0xff]
    %v61 = vld [vmem:[%s0 + $0x138] sm:$0xff]
    %v62 = vld [vmem:[%s0 + $0x140] sm:$0xff]
    %v63 = vld [vmem:[%s0 + $0x148] sm:$0xff]
    %v64 = vld [vmem:[%s0 + $0x150] sm:$0xff]
    %v65 = vld [vmem:[%s0 + $0x158] sm:$0xff]
    %v66 = vld [vmem:[%s0 + $0x160] sm:$0xff]
    %v67 = vld [vmem:[%s0 + $0x168] sm:$0xff]
    %v68 = vld [vmem:[%s0 + $0x170] sm:$0xff]
    %v69 = vld [vmem:[%s0 + $0x178] sm:$0xff]
    %v70 = vld [vmem:[%s0 + $0x180] sm:$0xff]
    %v71 = vld [vmem:[%s0 + $0x188] sm:$0xff]
    %v72 = vld [vmem:[%s0 + $0x190] sm:$0xff]
    %v73 = vld [vmem:[%s0 + $0x198] sm:$0xff]
    %v74 = vld [vmem:[%s0 + $0x1a0] sm:$0xff]
    %v75 = vld [vmem:[%s0 + $0x1a8] sm:$0xff]
    %v76 = vld [vmem:[%s0 + $0x1b0] sm:$0xff]
    %v77 = vld [vmem:[%s0 + $0x1b8] sm:$0xff]
    %v78 = vld [vmem:[%s0 + $0x1c0] sm:$0xff]
    %v79 = vld [vmem:[%s0 + $0x1c8] sm:$0xff]
    %v80 = vld [vmem:[%s0 + $0x1d0] sm:$0xff]
    %v81 = vld [vmem:[%s0 + $0x1d8] sm:$0xff]
    %v82 = vld [vmem:[%s0 + $0x1e0] sm:$0xff]
    %v83 = vld [vmem:[%s0 + $0x1e8] sm:$0xff]
    %v84 = vld [vmem:[%s0 + $0x1f0] sm:$0xff]
    %v85 = vld [vmem:[%s0 + $0x1f8] sm:$0xff]
    %v86 = vld [vmem:[%s1] sm:$0xff]
    %v87 = vld [vmem:[%s1 + $0x8] sm:$0xff]
    %v88 = vld [vmem:[%s3] sm:$0x1]
    %v90 = vlaneseq
    %v91 = vshrl.u32 %v90, 7
    %v92 = vsub.s32 0, %v91
    %v93 = vrot.slane %v88, %v92
    %vm95 = vcmask 130048
    %v97 = vsel %vm95, %v22, 0
    %v100 = vsel %vm95, %v23, 0
    %v103 = vsel %vm95, %v24, 0
    %v106 = vsel %vm95, %v25, 0
    %v109 = vsel %vm95, %v26, 0
    %v112 = vsel %vm95, %v27, 0
    %v115 = vsel %vm95, %v28, 0
    %v118 = vsel %vm95, %v29, 0
    %v121 = vsel %vm95, %v30, 0
    %v124 = vsel %vm95, %v31, 0
    %v127 = vsel %vm95, %v32, 0
    %v130 = vsel %vm95, %v33, 0
    %v133 = vsel %vm95, %v34, 0
    %v136 = vsel %vm95, %v35, 0
    %v139 = vsel %vm95, %v36, 0
    %v142 = vsel %vm95, %v37, 0
    %v145 = vsel %vm95, %v38, 0
    %v148 = vsel %vm95, %v39, 0
    %v151 = vsel %vm95, %v40, 0
    %v154 = vsel %vm95, %v41, 0
    %v157 = vsel %vm95, %v42, 0
    %v160 = vsel %vm95, %v43, 0
    %v163 = vsel %vm95, %v44, 0
    %v166 = vsel %vm95, %v45, 0
    %v169 = vsel %vm95, %v46, 0
    %v172 = vsel %vm95, %v47, 0
    %v175 = vsel %vm95, %v48, 0
    %v178 = vsel %vm95, %v49, 0
    %v181 = vsel %vm95, %v50, 0
    %v184 = vsel %vm95, %v51, 0
    %v187 = vsel %vm95, %v52, 0
    %v190 = vsel %vm95, %v53, 0
    %v193 = vsel %vm95, %v54, 0
    %v196 = vsel %vm95, %v55, 0
    %v199 = vsel %vm95, %v56, 0
    %v202 = vsel %vm95, %v57, 0
    %v205 = vsel %vm95, %v58, 0
    %v208 = vsel %vm95, %v59, 0
    %v211 = vsel %vm95, %v60, 0
    %v214 = vsel %vm95, %v61, 0
    %v217 = vsel %vm95, %v62, 0
    %v220 = vsel %vm95, %v63, 0
    %v223 = vsel %vm95, %v64, 0
    %v226 = vsel %vm95, %v65, 0
    %v229 = vsel %vm95, %v66, 0
    %v232 = vsel %vm95, %v67, 0
    %v235 = vsel %vm95, %v68, 0
    %v238 = vsel %vm95, %v69, 0
    %v241 = vsel %vm95, %v70, 0
    %v244 = vsel %vm95, %v71, 0
    %v247 = vsel %vm95, %v72, 0
    %v250 = vsel %vm95, %v73, 0
    %v253 = vsel %vm95, %v74, 0
    %v256 = vsel %vm95, %v75, 0
    %v259 = vsel %vm95, %v76, 0
    %v262 = vsel %vm95, %v77, 0
    %v265 = vsel %vm95, %v78, 0
    %v268 = vsel %vm95, %v79, 0
    %v271 = vsel %vm95, %v80, 0
    %v274 = vsel %vm95, %v81, 0
    %v277 = vsel %vm95, %v82, 0
    %v280 = vsel %vm95, %v83, 0
    %v283 = vsel %vm95, %v84, 0
    %v286 = vsel %vm95, %v85, 0
    %288 = vmatprep.subr.mxu0 0.0
    %289 = vmatpush1.msra.mxu0 %v86
    %290 = vmatprep.subr.mxu0 0.0
    %291 = vmatpush1.msra.mxu0 %v87
    %292 = vmatprep.subr.mxu0 0.0
    %293 = vmatpush1.msra.mxu0 0.0
    %294 = vmatprep.subr.mxu0 0.0
    %295 = vmatpush1.msra.mxu0 0.0
    %296 = vmatprep.subr.mxu0 0.0
    %297 = vmatpush1.msra.mxu0 0.0
    %298 = vmatprep.subr.mxu0 0.0
    %299 = vmatpush1.msra.mxu0 0.0
    %300 = vmatprep.subr.mxu0 0.0
    %301 = vmatpush1.msra.mxu0 0.0
    %302 = vmatprep.subr.mxu0 0.0
    %303 = vmatpush1.msra.mxu0 0.0
    %304 = vmatprep.subr.mxu0 0.0
    %305 = vmatpush1.msra.mxu0 0.0
    %306 = vmatprep.subr.mxu0 0.0
    %307 = vmatpush1.msra.mxu0 0.0
    %308 = vmatprep.subr.mxu0 0.0
    %309 = vmatpush1.msra.mxu0 0.0
    %310 = vmatprep.subr.mxu0 0.0
    %311 = vmatpush1.msra.mxu0 0.0
    %312 = vmatprep.subr.mxu0 0.0
    %313 = vmatpush1.msra.mxu0 0.0
    %314 = vmatprep.subr.mxu0 0.0
    %315 = vmatpush1.msra.mxu0 0.0
    %316 = vmatprep.subr.mxu0 0.0
    %317 = vmatpush1.msra.mxu0 0.0
    %318 = vmatprep.subr.mxu0 0.0
    %319 = vmatpush1.msra.mxu0 0.0
    %320 = vmatprep.subr.mxu0 0.0
    %321 = vmatpush1.msra.mxu0 0.0
    %322 = vmatprep.subr.mxu0 0.0
    %323 = vmatpush1.msra.mxu0 0.0
    %324 = vmatprep.subr.mxu0 0.0
    %325 = vmatpush1.msra.mxu0 0.0
    %326 = vmatprep.subr.mxu0 0.0
    %327 = vmatpush1.msra.mxu0 0.0
    %328 = vmatprep.subr.mxu0 0.0
    %329 = vmatpush1.msra.mxu0 0.0
    %330 = vmatprep.subr.mxu0 0.0
    %331 = vmatpush1.msra.mxu0 0.0
    %332 = vmatprep.subr.mxu0 0.0
    %333 = vmatpush1.msra.mxu0 0.0
    %334 = vmatprep.subr.mxu0 0.0
    %335 = vmatpush1.msra.mxu0 0.0
    %336 = vmatprep.subr.mxu0 0.0
    %337 = vmatpush1.msra.mxu0 0.0
    %338 = vmatprep.subr.mxu0 0.0
    %339 = vmatpush1.msra.mxu0 0.0
    %340 = vmatprep.subr.mxu0 0.0
    %341 = vmatpush1.msra.mxu0 0.0
    %342 = vmatprep.subr.mxu0 0.0
    %343 = vmatpush1.msra.mxu0 0.0
    %344 = vmatprep.subr.mxu0 0.0
    %345 = vmatpush1.msra.mxu0 0.0
    %346 = vmatprep.subr.mxu0 0.0
    %347 = vmatpush1.msra.mxu0 0.0
    %348 = vmatprep.subr.mxu0 0.0
    %349 = vmatpush1.msra.mxu0 0.0
    %350 = vmatprep.subr.mxu0 0.0
    %351 = vmatpush1.msra.mxu0 0.0
    %352 = vmatprep.mubr.f32.mxu0 0.0
    %353 = vmatmul.mubr.f32.gmra.mrb[0].mxu0 %v97
    %v354 = vpop.f32.mrb[0].mxu0
    %v355 = vadd.f32 %v93, %v354
    %v356 = vpop.f32.mrb[0].mxu0
    %357 = vmatprep.mubr.f32.mxu0 0.0
    %358 = vmatmul.mubr.f32.gmra.mrb[0].mxu0 %v100
    %v359 = vpop.f32.mrb[0].mxu0
    %v360 = vadd.f32 %v93, %v359
    %v361 = vpop.f32.mrb[0].mxu0
    %362 = vmatprep.mubr.f32.mxu0 0.0
    %363 = vmatmul.mubr.f32.gmra.mrb[0].mxu0 %v103
    %v364 = vpop.f32.mrb[0].mxu0
    %v365 = vadd.f32 %v93, %v364
    %v366 = vpop.f32.mrb[0].mxu0
    %367 = vmatprep.mubr.f32.mxu0 0.0
    %368 = vmatmul.mubr.f32.gmra.mrb[0].mxu0 %v106
    %v369 = vpop.f32.mrb[0].mxu0
    %v370 = vadd.f32 %v93, %v369
    %v371 = vpop.f32.mrb[0].mxu0
    %372 = vmatprep.mubr.f32.mxu0 0.0
    %373 = vmatmul.mubr.f32.gmra.mrb[0].mxu0 %v109
    %v374 = vpop.f32.mrb[0].mxu0
    %v375 = vadd.f32 %v93, %v374
    %v376 = vpop.f32.mrb[0].mxu0
    %377 = vmatprep.mubr.f32.mxu0 0.0
    %378 = vmatmul.mubr.f32.gmra.mrb[0].mxu0 %v112
    %v379 = vpop.f32.mrb[0].mxu0
    %v380 = vadd.f32 %v93, %v379
    %v381 = vpop.f32.mrb[0].mxu0
    %382 = vmatprep.mubr.f32.mxu0 0.0
    %383 = vmatmul.mubr.f32.gmra.mrb[0].mxu0 %v115
    %v384 = vpop.f32.mrb[0].mxu0
    %v385 = vadd.f32 %v93, %v384
    %v386 = vpop.f32.mrb[0].mxu0
    %387 = vmatprep.mubr.f32.mxu0 0.0
    %388 = vmatmul.mubr.f32.gmra.mrb[0].mxu0 %v118
    %v389 = vpop.f32.mrb[0].mxu0
    %v390 = vadd.f32 %v93, %v389
    %v391 = vpop.f32.mrb[0].mxu0
    %392 = vmatprep.mubr.f32.mxu0 0.0
    %393 = vmatmul.mubr.f32.gmra.mrb[0].mxu0 %v121
    %v394 = vpop.f32.mrb[0].mxu0
    %v395 = vadd.f32 %v93, %v394
    %v396 = vpop.f32.mrb[0].mxu0
    %397 = vmatprep.mubr.f32.mxu0 0.0
    %398 = vmatmul.mubr.f32.gmra.mrb[0].mxu0 %v124
    %v399 = vpop.f32.mrb[0].mxu0
    %v400 = vadd.f32 %v93, %v399
    %v401 = vpop.f32.mrb[0].mxu0
    %402 = vmatprep.mubr.f32.mxu0 0.0
    %403 = vmatmul.mubr.f32.gmra.mrb[0].mxu0 %v127
    %v404 = vpop.f32.mrb[0].mxu0
    %v405 = vadd.f32 %v93, %v404
    %v406 = vpop.f32.mrb[0].mxu0
    %407 = vmatprep.mubr.f32.mxu0 0.0
    %408 = vmatmul.mubr.f32.gmra.mrb[0].mxu0 %v130
    %v409 = vpop.f32.mrb[0].mxu0
    %v410 = vadd.f32 %v93, %v409
    %v411 = vpop.f32.mrb[0].mxu0
    %412 = vmatprep.mubr.f32.mxu0 0.0
    %413 = vmatmul.mubr.f32.gmra.mrb[0].mxu0 %v133
    %v414 = vpop.f32.mrb[0].mxu0
    %v415 = vadd.f32 %v93, %v414
    %v416 = vpop.f32.mrb[0].mxu0
    %417 = vmatprep.mubr.f32.mxu0 0.0
    %418 = vmatmul.mubr.f32.gmra.mrb[0].mxu0 %v136
    %v419 = vpop.f32.mrb[0].mxu0
    %v420 = vadd.f32 %v93, %v419
    %v421 = vpop.f32.mrb[0].mxu0
    %422 = vmatprep.mubr.f32.mxu0 0.0
    %423 = vmatmul.mubr.f32.gmra.mrb[0].mxu0 %v139
    %v424 = vpop.f32.mrb[0].mxu0
    %v425 = vadd.f32 %v93, %v424
    %v426 = vpop.f32.mrb[0].mxu0
    %427 = vmatprep.mubr.f32.mxu0 0.0
    %428 = vmatmul.mubr.f32.gmra.mrb[0].mxu0 %v142
    %v429 = vpop.f32.mrb[0].mxu0
    %v430 = vadd.f32 %v93, %v429
    %v431 = vpop.f32.mrb[0].mxu0
    %432 = vmatprep.mubr.f32.mxu0 0.0
    %433 = vmatmul.mubr.f32.gmra.mrb[0].mxu0 %v145
    %v434 = vpop.f32.mrb[0].mxu0
    %v435 = vadd.f32 %v93, %v434
    %v436 = vpop.f32.mrb[0].mxu0
    %437 = vmatprep.mubr.f32.mxu0 0.0
    %438 = vmatmul.mubr.f32.gmra.mrb[0].mxu0 %v148
    %v439 = vpop.f32.mrb[0].mxu0
    %v440 = vadd.f32 %v93, %v439
    %v441 = vpop.f32.mrb[0].mxu0
    %442 = vmatprep.mubr.f32.mxu0 0.0
    %443 = vmatmul.mubr.f32.gmra.mrb[0].mxu0 %v151
    %v444 = vpop.f32.mrb[0].mxu0
    %v445 = vadd.f32 %v93, %v444
    %v446 = vpop.f32.mrb[0].mxu0
    %447 = vmatprep.mubr.f32.mxu0 0.0
    %448 = vmatmul.mubr.f32.gmra.mrb[0].mxu0 %v154
    %v449 = vpop.f32.mrb[0].mxu0
    %v450 = vadd.f32 %v93, %v449
    %v451 = vpop.f32.mrb[0].mxu0
    %452 = vmatprep.mubr.f32.mxu0 0.0
    %453 = vmatmul.mubr.f32.gmra.mrb[0].mxu0 %v157
    %v454 = vpop.f32.mrb[0].mxu0
    %v455 = vadd.f32 %v93, %v454
    %v456 = vpop.f32.mrb[0].mxu0
    %457 = vmatprep.mubr.f32.mxu0 0.0
    %458 = vmatmul.mubr.f32.gmra.mrb[0].mxu0 %v160
    %v459 = vpop.f32.mrb[0].mxu0
    %v460 = vadd.f32 %v93, %v459
    %v461 = vpop.f32.mrb[0].mxu0
    %462 = vmatprep.mubr.f32.mxu0 0.0
    %463 = vmatmul.mubr.f32.gmra.mrb[0].mxu0 %v163
    %v464 = vpop.f32.mrb[0].mxu0
    %v465 = vadd.f32 %v93, %v464
    %v466 = vpop.f32.mrb[0].mxu0
    %467 = vmatprep.mubr.f32.mxu0 0.0
    %468 = vmatmul.mubr.f32.gmra.mrb[0].mxu0 %v166
    %v469 = vpop.f32.mrb[0].mxu0
    %v470 = vadd.f32 %v93, %v469
    %v471 = vpop.f32.mrb[0].mxu0
    %472 = vmatprep.mubr.f32.mxu0 0.0
    %473 = vmatmul.mubr.f32.gmra.mrb[0].mxu0 %v169
    %v474 = vpop.f32.mrb[0].mxu0
    %v475 = vadd.f32 %v93, %v474
    %v476 = vpop.f32.mrb[0].mxu0
    %477 = vmatprep.mubr.f32.mxu0 0.0
    %478 = vmatmul.mubr.f32.gmra.mrb[0].mxu0 %v172
    %v479 = vpop.f32.mrb[0].mxu0
    %v480 = vadd.f32 %v93, %v479
    %v481 = vpop.f32.mrb[0].mxu0
    %482 = vmatprep.mubr.f32.mxu0 0.0
    %483 = vmatmul.mubr.f32.gmra.mrb[0].mxu0 %v175
    %v484 = vpop.f32.mrb[0].mxu0
    %v485 = vadd.f32 %v93, %v484
    %v486 = vpop.f32.mrb[0].mxu0
    %487 = vmatprep.mubr.f32.mxu0 0.0
    %488 = vmatmul.mubr.f32.gmra.mrb[0].mxu0 %v178
    %v489 = vpop.f32.mrb[0].mxu0
    %v490 = vadd.f32 %v93, %v489
    %v491 = vpop.f32.mrb[0].mxu0
    %492 = vmatprep.mubr.f32.mxu0 0.0
    %493 = vmatmul.mubr.f32.gmra.mrb[0].mxu0 %v181
    %v494 = vpop.f32.mrb[0].mxu0
    %v495 = vadd.f32 %v93, %v494
    %v496 = vpop.f32.mrb[0].mxu0
    %497 = vmatprep.mubr.f32.mxu0 0.0
    %498 = vmatmul.mubr.f32.gmra.mrb[0].mxu0 %v184
    %v499 = vpop.f32.mrb[0].mxu0
    %v500 = vadd.f32 %v93, %v499
    %v501 = vpop.f32.mrb[0].mxu0
    %502 = vmatprep.mubr.f32.mxu0 0.0
    %503 = vmatmul.mubr.f32.gmra.mrb[0].mxu0 %v187
    %v504 = vpop.f32.mrb[0].mxu0
    %v505 = vadd.f32 %v93, %v504
    %v506 = vpop.f32.mrb[0].mxu0
    %507 = vmatprep.mubr.f32.mxu0 0.0
    %508 = vmatmul.mubr.f32.gmra.mrb[0].mxu0 %v190
    %v509 = vpop.f32.mrb[0].mxu0
    %v510 = vadd.f32 %v93, %v509
    %v511 = vpop.f32.mrb[0].mxu0
    %512 = vmatprep.mubr.f32.mxu0 0.0
    %513 = vmatmul.mubr.f32.gmra.mrb[0].mxu0 %v193
    %v514 = vpop.f32.mrb[0].mxu0
    %v515 = vadd.f32 %v93, %v514
    %v516 = vpop.f32.mrb[0].mxu0
    %517 = vmatprep.mubr.f32.mxu0 0.0
    %518 = vmatmul.mubr.f32.gmra.mrb[0].mxu0 %v196
    %v519 = vpop.f32.mrb[0].mxu0
    %v520 = vadd.f32 %v93, %v519
    %v521 = vpop.f32.mrb[0].mxu0
    %522 = vmatprep.mubr.f32.mxu0 0.0
    %523 = vmatmul.mubr.f32.gmra.mrb[0].mxu0 %v199
    %v524 = vpop.f32.mrb[0].mxu0
    %v525 = vadd.f32 %v93, %v524
    %v526 = vpop.f32.mrb[0].mxu0
    %527 = vmatprep.mubr.f32.mxu0 0.0
    %528 = vmatmul.mubr.f32.gmra.mrb[0].mxu0 %v202
    %v529 = vpop.f32.mrb[0].mxu0
    %v530 = vadd.f32 %v93, %v529
    %v531 = vpop.f32.mrb[0].mxu0
    %532 = vmatprep.mubr.f32.mxu0 0.0
    %533 = vmatmul.mubr.f32.gmra.mrb[0].mxu0 %v205
    %v534 = vpop.f32.mrb[0].mxu0
    %v535 = vadd.f32 %v93, %v534
    %v536 = vpop.f32.mrb[0].mxu0
    %537 = vmatprep.mubr.f32.mxu0 0.0
    %538 = vmatmul.mubr.f32.gmra.mrb[0].mxu0 %v208
    %v539 = vpop.f32.mrb[0].mxu0
    %v540 = vadd.f32 %v93, %v539
    %v541 = vpop.f32.mrb[0].mxu0
    %542 = vmatprep.mubr.f32.mxu0 0.0
    %543 = vmatmul.mubr.f32.gmra.mrb[0].mxu0 %v211
    %v544 = vpop.f32.mrb[0].mxu0
    %v545 = vadd.f32 %v93, %v544
    %v546 = vpop.f32.mrb[0].mxu0
    %547 = vmatprep.mubr.f32.mxu0 0.0
    %548 = vmatmul.mubr.f32.gmra.mrb[0].mxu0 %v214
    %v549 = vpop.f32.mrb[0].mxu0
    %v550 = vadd.f32 %v93, %v549
    %v551 = vpop.f32.mrb[0].mxu0
    %552 = vmatprep.mubr.f32.mxu0 0.0
    %553 = vmatmul.mubr.f32.gmra.mrb[0].mxu0 %v217
    %v554 = vpop.f32.mrb[0].mxu0
    %v555 = vadd.f32 %v93, %v554
    %v556 = vpop.f32.mrb[0].mxu0
    %557 = vmatprep.mubr.f32.mxu0 0.0
    %558 = vmatmul.mubr.f32.gmra.mrb[0].mxu0 %v220
    %v559 = vpop.f32.mrb[0].mxu0
    %v560 = vadd.f32 %v93, %v559
    %v561 = vpop.f32.mrb[0].mxu0
    %562 = vmatprep.mubr.f32.mxu0 0.0
    %563 = vmatmul.mubr.f32.gmra.mrb[0].mxu0 %v223
    %v564 = vpop.f32.mrb[0].mxu0
    %v565 = vadd.f32 %v93, %v564
    %v566 = vpop.f32.mrb[0].mxu0
    %567 = vmatprep.mubr.f32.mxu0 0.0
    %568 = vmatmul.mubr.f32.gmra.mrb[0].mxu0 %v226
    %v569 = vpop.f32.mrb[0].mxu0
    %v570 = vadd.f32 %v93, %v569
    %v571 = vpop.f32.mrb[0].mxu0
    %572 = vmatprep.mubr.f32.mxu0 0.0
    %573 = vmatmul.mubr.f32.gmra.mrb[0].mxu0 %v229
    %v574 = vpop.f32.mrb[0].mxu0
    %v575 = vadd.f32 %v93, %v574
    %v576 = vpop.f32.mrb[0].mxu0
    %577 = vmatprep.mubr.f32.mxu0 0.0
    %578 = vmatmul.mubr.f32.gmra.mrb[0].mxu0 %v232
    %v579 = vpop.f32.mrb[0].mxu0
    %v580 = vadd.f32 %v93, %v579
    %v581 = vpop.f32.mrb[0].mxu0
    %582 = vmatprep.mubr.f32.mxu0 0.0
    %583 = vmatmul.mubr.f32.gmra.mrb[0].mxu0 %v235
    %v584 = vpop.f32.mrb[0].mxu0
    %v585 = vadd.f32 %v93, %v584
    %v586 = vpop.f32.mrb[0].mxu0
    %587 = vmatprep.mubr.f32.mxu0 0.0
    %588 = vmatmul.mubr.f32.gmra.mrb[0].mxu0 %v238
    %v589 = vpop.f32.mrb[0].mxu0
    %v590 = vadd.f32 %v93, %v589
    %v591 = vpop.f32.mrb[0].mxu0
    %592 = vmatprep.mubr.f32.mxu0 0.0
    %593 = vmatmul.mubr.f32.gmra.mrb[0].mxu0 %v241
    %v594 = vpop.f32.mrb[0].mxu0
    %v595 = vadd.f32 %v93, %v594
    %v596 = vpop.f32.mrb[0].mxu0
    %597 = vmatprep.mubr.f32.mxu0 0.0
    %598 = vmatmul.mubr.f32.gmra.mrb[0].mxu0 %v244
    %v599 = vpop.f32.mrb[0].mxu0
    %v600 = vadd.f32 %v93, %v599
    %v601 = vpop.f32.mrb[0].mxu0
    %602 = vmatprep.mubr.f32.mxu0 0.0
    %603 = vmatmul.mubr.f32.gmra.mrb[0].mxu0 %v247
    %v604 = vpop.f32.mrb[0].mxu0
    %v605 = vadd.f32 %v93, %v604
    %v606 = vpop.f32.mrb[0].mxu0
    %607 = vmatprep.mubr.f32.mxu0 0.0
    %608 = vmatmul.mubr.f32.gmra.mrb[0].mxu0 %v250
    %v609 = vpop.f32.mrb[0].mxu0
    %v610 = vadd.f32 %v93, %v609
    %v611 = vpop.f32.mrb[0].mxu0
    %612 = vmatprep.mubr.f32.mxu0 0.0
    %613 = vmatmul.mubr.f32.gmra.mrb[0].mxu0 %v253
    %v614 = vpop.f32.mrb[0].mxu0
    %v615 = vadd.f32 %v93, %v614
    %v616 = vpop.f32.mrb[0].mxu0
    %617 = vmatprep.mubr.f32.mxu0 0.0
    %618 = vmatmul.mubr.f32.gmra.mrb[0].mxu0 %v256
    %v619 = vpop.f32.mrb[0].mxu0
    %v620 = vadd.f32 %v93, %v619
    %v621 = vpop.f32.mrb[0].mxu0
    %622 = vmatprep.mubr.f32.mxu0 0.0
    %623 = vmatmul.mubr.f32.gmra.mrb[0].mxu0 %v259
    %v624 = vpop.f32.mrb[0].mxu0
    %v625 = vadd.f32 %v93, %v624
    %v626 = vpop.f32.mrb[0].mxu0
    %627 = vmatprep.mubr.f32.mxu0 0.0
    %628 = vmatmul.mubr.f32.gmra.mrb[0].mxu0 %v262
    %v629 = vpop.f32.mrb[0].mxu0
    %v630 = vadd.f32 %v93, %v629
    %v631 = vpop.f32.mrb[0].mxu0
    %632 = vmatprep.mubr.f32.mxu0 0.0
    %633 = vmatmul.mubr.f32.gmra.mrb[0].mxu0 %v265
    %v634 = vpop.f32.mrb[0].mxu0
    %v635 = vadd.f32 %v93, %v634
    %v636 = vpop.f32.mrb[0].mxu0
    %637 = vmatprep.mubr.f32.mxu0 0.0
    %638 = vmatmul.mubr.f32.gmra.mrb[0].mxu0 %v268
    %v639 = vpop.f32.mrb[0].mxu0
    %v640 = vadd.f32 %v93, %v639
    %v641 = vpop.f32.mrb[0].mxu0
    %642 = vmatprep.mubr.f32.mxu0 0.0
    %643 = vmatmul.mubr.f32.gmra.mrb[0].mxu0 %v271
    %v644 = vpop.f32.mrb[0].mxu0
    %v645 = vadd.f32 %v93, %v644
    %v646 = vpop.f32.mrb[0].mxu0
    %647 = vmatprep.mubr.f32.mxu0 0.0
    %648 = vmatmul.mubr.f32.gmra.mrb[0].mxu0 %v274
    %v649 = vpop.f32.mrb[0].mxu0
    %v650 = vadd.f32 %v93, %v649
    %v651 = vpop.f32.mrb[0].mxu0
    %652 = vmatprep.mubr.f32.mxu0 0.0
    %653 = vmatmul.mubr.f32.gmra.mrb[0].mxu0 %v277
    %v654 = vpop.f32.mrb[0].mxu0
    %v655 = vadd.f32 %v93, %v654
    %v656 = vpop.f32.mrb[0].mxu0
    %657 = vmatprep.mubr.f32.mxu0 0.0
    %658 = vmatmul.mubr.f32.gmra.mrb[0].mxu0 %v280
    %v659 = vpop.f32.mrb[0].mxu0
    %v660 = vadd.f32 %v93, %v659
    %v661 = vpop.f32.mrb[0].mxu0
    %662 = vmatprep.mubr.f32.mxu0 0.0
    %663 = vmatmul.mubr.f32.gmra.mrb[0].mxu0 %v283
    %v664 = vpop.f32.mrb[0].mxu0
    %v665 = vadd.f32 %v93, %v664
    %v666 = vpop.f32.mrb[0].mxu0
    %667 = vmatprep.mubr.f32.mxu0 0.0
    %668 = vmatmul.mubr.f32.gmra.mrb[0].mxu0 %v286
    %v669 = vpop.f32.mrb[0].mxu0
    %v670 = vadd.f32 %v93, %v669
    %v671 = vpop.f32.mrb[0].mxu0
    %672 = vdwg.mxu0
    %673 = vst [vmem:[#allocation2] sm:$0xff] %v355
    %674 = vst [vmem:[#allocation2 + $0x8] sm:$0xff] %v360
    %675 = vst [vmem:[#allocation2 + $0x10] sm:$0xff] %v365
    %676 = vst [vmem:[#allocation2 + $0x18] sm:$0xff] %v370
    %677 = vst [vmem:[#allocation2 + $0x20] sm:$0xff] %v375
    %678 = vst [vmem:[#allocation2 + $0x28] sm:$0xff] %v380
    %679 = vst [vmem:[#allocation2 + $0x30] sm:$0xff] %v385
    %680 = vst [vmem:[#allocation2 + $0x38] sm:$0xff] %v390
    %681 = vst [vmem:[#allocation2 + $0x40] sm:$0xff] %v395
    %682 = vst [vmem:[#allocation2 + $0x48] sm:$0xff] %v400
    %683 = vst [vmem:[#allocation2 + $0x50] sm:$0xff] %v405
    %684 = vst [vmem:[#allocation2 + $0x58] sm:$0xff] %v410
    %685 = vst [vmem:[#allocation2 + $0x60] sm:$0xff] %v415
    %686 = vst [vmem:[#allocation2 + $0x68] sm:$0xff] %v420
    %687 = vst [vmem:[#allocation2 + $0x70] sm:$0xff] %v425
    %688 = vst [vmem:[#allocation2 + $0x78] sm:$0xff] %v430
    %689 = vst [vmem:[#allocation2 + $0x80] sm:$0xff] %v435
    %690 = vst [vmem:[#allocation2 + $0x88] sm:$0xff] %v440
    %691 = vst [vmem:[#allocation2 + $0x90] sm:$0xff] %v445
    %692 = vst [vmem:[#allocation2 + $0x98] sm:$0xff] %v450
    %693 = vst [vmem:[#allocation2 + $0xa0] sm:$0xff] %v455
    %694 = vst [vmem:[#allocation2 + $0xa8] sm:$0xff] %v460
    %695 = vst [vmem:[#allocation2 + $0xb0] sm:$0xff] %v465
    %696 = vst [vmem:[#allocation2 + $0xb8] sm:$0xff] %v470
    %697 = vst [vmem:[#allocation2 + $0xc0] sm:$0xff] %v475
    %698 = vst [vmem:[#allocation2 + $0xc8] sm:$0xff] %v480
    %699 = vst [vmem:[#allocation2 + $0xd0] sm:$0xff] %v485
    %700 = vst [vmem:[#allocation2 + $0xd8] sm:$0xff] %v490
    %701 = vst [vmem:[#allocation2 + $0xe0] sm:$0xff] %v495
    %702 = vst [vmem:[#allocation2 + $0xe8] sm:$0xff] %v500
    %703 = vst [vmem:[#allocation2 + $0xf0] sm:$0xff] %v505
    %704 = vst [vmem:[#allocation2 + $0xf8] sm:$0xff] %v510
    %705 = vst [vmem:[#allocation2 + $0x100] sm:$0xff] %v515
    %706 = vst [vmem:[#allocation2 + $0x108] sm:$0xff] %v520
    %707 = vst [vmem:[#allocation2 + $0x110] sm:$0xff] %v525
    %708 = vst [vmem:[#allocation2 + $0x118] sm:$0xff] %v530
    %709 = vst [vmem:[#allocation2 + $0x120] sm:$0xff] %v535
    %710 = vst [vmem:[#allocation2 + $0x128] sm:$0xff] %v540
    %711 = vst [vmem:[#allocation2 + $0x130] sm:$0xff] %v545
    %712 = vst [vmem:[#allocation2 + $0x138] sm:$0xff] %v550
    %713 = vst [vmem:[#allocation2 + $0x140] sm:$0xff] %v555
    %714 = vst [vmem:[#allocation2 + $0x148] sm:$0xff] %v560
    %715 = vst [vmem:[#allocation2 + $0x150] sm:$0xff] %v565
    %716 = vst [vmem:[#allocation2 + $0x158] sm:$0xff] %v570
    %717 = vst [vmem:[#allocation2 + $0x160] sm:$0xff] %v575
    %718 = vst [vmem:[#allocation2 + $0x168] sm:$0xff] %v580
    %719 = vst [vmem:[#allocation2 + $0x170] sm:$0xff] %v585
    %720 = vst [vmem:[#allocation2 + $0x178] sm:$0xff] %v590
    %721 = vst [vmem:[#allocation2 + $0x180] sm:$0xff] %v595
    %722 = vst [vmem:[#allocation2 + $0x188] sm:$0xff] %v600
    %723 = vst [vmem:[#allocation2 + $0x190] sm:$0xff] %v605
    %724 = vst [vmem:[#allocation2 + $0x198] sm:$0xff] %v610
    %725 = vst [vmem:[#allocation2 + $0x1a0] sm:$0xff] %v615
    %726 = vst [vmem:[#allocation2 + $0x1a8] sm:$0xff] %v620
    %727 = vst [vmem:[#allocation2 + $0x1b0] sm:$0xff] %v625
    %728 = vst [vmem:[#allocation2 + $0x1b8] sm:$0xff] %v630
    %729 = vst [vmem:[#allocation2 + $0x1c0] sm:$0xff] %v635
    %730 = vst [vmem:[#allocation2 + $0x1c8] sm:$0xff] %v640
    %731 = vst [vmem:[#allocation2 + $0x1d0] sm:$0xff] %v645
    %732 = vst [vmem:[#allocation2 + $0x1d8] sm:$0xff] %v650
    %733 = vst [vmem:[#allocation2 + $0x1e0] sm:$0xff] %v655
    %734 = vst [vmem:[#allocation2 + $0x1e8] sm:$0xff] %v660
    %735 = vst [vmem:[#allocation2 + $0x1f0] sm:$0xff] %v665
    %736 = vst [vmem:[#allocation2 + $0x1f8] sm:$0xff] %v670
    %v737 = vld [vmem:[#allocation2] sm:$0xff]
    %v738 = vld [vmem:[#allocation2 + $0x8] sm:$0xff]
    %v739 = vld [vmem:[#allocation2 + $0x10] sm:$0xff]
    %v740 = vld [vmem:[#allocation2 + $0x18] sm:$0xff]
    %v741 = vld [vmem:[#allocation2 + $0x20] sm:$0xff]
    %v742 = vld [vmem:[#allocation2 + $0x28] sm:$0xff]
    %v743 = vld [vmem:[#allocation2 + $0x30] sm:$0xff]
    %v744 = vld [vmem:[#allocation2 + $0x38] sm:$0xff]
    %vm745 = vcmask 261120
    %v747 = vsel %vm745, 0.0, 0
    %749 = vmatprep.subr.mxu0 0.0
    %750 = vmatpush1.msra.mxu0 %v18
    %751 = vmatprep.subr.mxu0 0.0
    %752 = vmatpush1.msra.mxu0 %v19
    %753 = vmatprep.subr.mxu0 0.0
    %754 = vmatpush1.msra.mxu0 %v20
    %755 = vmatprep.subr.mxu0 0.0
    %756 = vmatpush1.msra.mxu0 %v21
    %757 = vmatprep.subr.mxu0 0.0
    %758 = vmatpush1.msra.mxu0 0.0
    %759 = vmatprep.subr.mxu0 0.0
    %760 = vmatpush1.msra.mxu0 0.0
    %761 = vmatprep.subr.mxu0 0.0
    %762 = vmatpush1.msra.mxu0 0.0
    %763 = vmatprep.subr.mxu0 0.0
    %764 = vmatpush1.msra.mxu0 0.0
    %765 = vmatprep.subr.mxu0 0.0
    %766 = vmatpush1.msra.mxu0 0.0
    %767 = vmatprep.subr.mxu0 0.0
    %768 = vmatpush1.msra.mxu0 0.0
    %769 = vmatprep.subr.mxu0 0.0
    %770 = vmatpush1.msra.mxu0 0.0
    %771 = vmatprep.subr.mxu0 0.0
    %772 = vmatpush1.msra.mxu0 0.0
    %773 = vmatprep.subr.mxu0 0.0
    %774 = vmatpush1.msra.mxu0 0.0
    %775 = vmatprep.subr.mxu0 0.0
    %776 = vmatpush1.msra.mxu0 0.0
    %777 = vmatprep.subr.mxu0 0.0
    %778 = vmatpush1.msra.mxu0 0.0
    %779 = vmatprep.subr.mxu0 0.0
    %780 = vmatpush1.msra.mxu0 0.0
    %781 = vmatprep.subr.mxu0 0.0
    %782 = vmatpush1.msra.mxu0 0.0
    %783 = vmatprep.subr.mxu0 0.0
    %784 = vmatpush1.msra.mxu0 0.0
    %785 = vmatprep.subr.mxu0 0.0
    %786 = vmatpush1.msra.mxu0 0.0
    %787 = vmatprep.subr.mxu0 0.0
    %788 = vmatpush1.msra.mxu0 0.0
    %789 = vmatprep.subr.mxu0 0.0
    %790 = vmatpush1.msra.mxu0 0.0
    %791 = vmatprep.subr.mxu0 0.0
    %792 = vmatpush1.msra.mxu0 0.0
    %793 = vmatprep.subr.mxu0 0.0
    %794 = vmatpush1.msra.mxu0 0.0
    %795 = vmatprep.subr.mxu0 0.0
    %796 = vmatpush1.msra.mxu0 0.0
    %797 = vmatprep.subr.mxu0 0.0
    %798 = vmatpush1.msra.mxu0 0.0
    %799 = vmatprep.subr.mxu0 0.0
    %800 = vmatpush1.msra.mxu0 0.0
    %801 = vmatprep.subr.mxu0 0.0
    %802 = vmatpush1.msra.mxu0 0.0
    %803 = vmatprep.subr.mxu0 0.0
    %804 = vmatpush1.msra.mxu0 0.0
    %805 = vmatprep.subr.mxu0 0.0
    %806 = vmatpush1.msra.mxu0 0.0
    %807 = vmatprep.subr.mxu0 0.0
    %808 = vmatpush1.msra.mxu0 0.0
    %809 = vmatprep.subr.mxu0 0.0
    %810 = vmatpush1.msra.mxu0 0.0
    %811 = vmatprep.subr.mxu0 0.0
    %812 = vmatpush1.msra.mxu0 0.0
    %813 = vmatprep.mubr.f32.mxu0 0.0
    %814 = vmatmul.mubr.f32.gmra.mrb[0].mxu0 %v747
    %v815 = vpop.f32.mrb[0].mxu0
    %v816 = vadd.f32 0.0, %v815
    %v817 = vpop.f32.mrb[0].mxu0
    %818 = vmatprep.mubr.f32.mxu0 0.0
    %819 = vmatmul.mubr.f32.gmra.mrb[0].mxu0 %v747
    %v820 = vpop.f32.mrb[0].mxu0
    %v821 = vadd.f32 0.0, %v820
    %v822 = vpop.f32.mrb[0].mxu0
    %823 = vmatprep.mubr.f32.mxu0 0.0
    %824 = vmatmul.mubr.f32.gmra.mrb[0].mxu0 %v747
    %v825 = vpop.f32.mrb[0].mxu0
    %v826 = vadd.f32 0.0, %v825
    %v827 = vpop.f32.mrb[0].mxu0
    %828 = vmatprep.mubr.f32.mxu0 0.0
    %829 = vmatmul.mubr.f32.gmra.mrb[0].mxu0 %v747
    %v830 = vpop.f32.mrb[0].mxu0
    %v831 = vadd.f32 0.0, %v830
    %v832 = vpop.f32.mrb[0].mxu0
    %833 = vmatprep.mubr.f32.mxu0 0.0
    %834 = vmatmul.mubr.f32.gmra.mrb[0].mxu0 %v747
    %v835 = vpop.f32.mrb[0].mxu0
    %v836 = vadd.f32 0.0, %v835
    %v837 = vpop.f32.mrb[0].mxu0
    %838 = vmatprep.mubr.f32.mxu0 0.0
    %839 = vmatmul.mubr.f32.gmra.mrb[0].mxu0 %v747
    %v840 = vpop.f32.mrb[0].mxu0
    %v841 = vadd.f32 0.0, %v840
    %v842 = vpop.f32.mrb[0].mxu0
    %843 = vmatprep.mubr.f32.mxu0 0.0
    %844 = vmatmul.mubr.f32.gmra.mrb[0].mxu0 %v747
    %v845 = vpop.f32.mrb[0].mxu0
    %v846 = vadd.f32 0.0, %v845
    %v847 = vpop.f32.mrb[0].mxu0
    %848 = vmatprep.mubr.f32.mxu0 0.0
    %849 = vmatmul.mubr.f32.gmra.mrb[0].mxu0 %v747
    %v850 = vpop.f32.mrb[0].mxu0
    %v851 = vadd.f32 0.0, %v850
    %v852 = vpop.f32.mrb[0].mxu0
    %853 = vdwg.mxu0
    %v854 = vadd.f32 %v737, %v816
    %v855 = vadd.f32 %v738, %v821
    %v856 = vadd.f32 %v739, %v826
    %v857 = vadd.f32 %v740, %v831
    %v858 = vadd.f32 %v741, %v836
    %v859 = vadd.f32 %v742, %v841
    %v860 = vadd.f32 %v743, %v846
    %v861 = vadd.f32 %v744, %v851
    %v862 = vtanh.pop %v854
    %v863 = vtanh.pop %v855
    %v864 = vtanh.pop %v856
    %v865 = vtanh.pop %v857
    %v866 = vtanh.pop %v858
    %v867 = vtanh.pop %v859
    %v868 = vtanh.pop %v860
    %v869 = vtanh.pop %v861
    %v870 = vmul.f32 %v862, 0.5
    %v871 = vmul.f32 %v863, 0.5
    %v872 = vmul.f32 %v864, 0.5
    %v873 = vmul.f32 %v865, 0.5
    %v874 = vmul.f32 %v866, 0.5
    %v875 = vmul.f32 %v867, 0.5
    %v876 = vmul.f32 %v868, 0.5
    %v877 = vmul.f32 %v869, 0.5
    %v878 = vadd.f32 %v870, 0.5
    %v879 = vadd.f32 %v871, 0.5
    %v880 = vadd.f32 %v872, 0.5
    %v881 = vadd.f32 %v873, 0.5
    %v882 = vadd.f32 %v874, 0.5
    %v883 = vadd.f32 %v875, 0.5
    %v884 = vadd.f32 %v876, 0.5
    %v885 = vadd.f32 %v877, 0.5
    %894 = vrot.lane.b32.xlu0 %v878, 96
    %v895 = vpop.permute.xlu0 %894
    %896 = vrot.lane.b32.xlu0 %v879, 96
    %v897 = vpop.permute.xlu0 %896
    %898 = vrot.lane.b32.xlu0 %v880, 96
    %v899 = vpop.permute.xlu0 %898
    %900 = vrot.lane.b32.xlu0 %v881, 96
    %v901 = vpop.permute.xlu0 %900
    %902 = vrot.lane.b32.xlu0 %v882, 96
    %v903 = vpop.permute.xlu0 %902
    %904 = vrot.lane.b32.xlu0 %v883, 96
    %v905 = vpop.permute.xlu0 %904
    %906 = vrot.lane.b32.xlu0 %v884, 96
    %v907 = vpop.permute.xlu0 %906
    %908 = vrot.lane.b32.xlu0 %v885, 96
    %v909 = vpop.permute.xlu0 %908
    %v918 = vmul.f32 %v862, %v895
    %v919 = vmul.f32 %v863, %v897
    %v920 = vmul.f32 %v864, %v899
    %v921 = vmul.f32 %v865, %v901
    %v922 = vmul.f32 %v866, %v903
    %v923 = vmul.f32 %v867, %v905
    %v924 = vmul.f32 %v868, %v907
    %v925 = vmul.f32 %v869, %v909
    %v926 = vmul.f32 %v878, 0.0
    %v927 = vmul.f32 %v879, 0.0
    %v928 = vmul.f32 %v880, 0.0
    %v929 = vmul.f32 %v881, 0.0
    %v930 = vmul.f32 %v882, 0.0
    %v931 = vmul.f32 %v883, 0.0
    %v932 = vmul.f32 %v884, 0.0
    %v933 = vmul.f32 %v885, 0.0
    %942 = vrot.lane.b32.xlu0 %v926, 64
    %v943 = vpop.permute.xlu0 %942
    %944 = vrot.lane.b32.xlu0 %v927, 64
    %v945 = vpop.permute.xlu0 %944
    %946 = vrot.lane.b32.xlu0 %v928, 64
    %v947 = vpop.permute.xlu0 %946
    %948 = vrot.lane.b32.xlu0 %v929, 64
    %v949 = vpop.permute.xlu0 %948
    %950 = vrot.lane.b32.xlu0 %v930, 64
    %v951 = vpop.permute.xlu0 %950
    %952 = vrot.lane.b32.xlu0 %v931, 64
    %v953 = vpop.permute.xlu0 %952
    %954 = vrot.lane.b32.xlu0 %v932, 64
    %v955 = vpop.permute.xlu0 %954
    %956 = vrot.lane.b32.xlu0 %v933, 64
    %v957 = vpop.permute.xlu0 %956
    %v966 = vadd.f32 %v918, %v943
    %v967 = vadd.f32 %v919, %v945
    %v968 = vadd.f32 %v920, %v947
    %v969 = vadd.f32 %v921, %v949
    %v970 = vadd.f32 %v922, %v951
    %v971 = vadd.f32 %v923, %v953
    %v972 = vadd.f32 %v924, %v955
    %v973 = vadd.f32 %v925, %v957
    %v974 = vtanh.pop %v966
    %v975 = vtanh.pop %v967
    %v976 = vtanh.pop %v968
    %v977 = vtanh.pop %v969
    %v978 = vtanh.pop %v970
    %v979 = vtanh.pop %v971
    %v980 = vtanh.pop %v972
    %v981 = vtanh.pop %v973
    %982 = vrot.lane.b32.xlu0 %v878, 32
    %v983 = vpop.permute.xlu0 %982
    %984 = vrot.lane.b32.xlu0 %v879, 32
    %v985 = vpop.permute.xlu0 %984
    %986 = vrot.lane.b32.xlu0 %v880, 32
    %v987 = vpop.permute.xlu0 %986
    %988 = vrot.lane.b32.xlu0 %v881, 32
    %v989 = vpop.permute.xlu0 %988
    %990 = vrot.lane.b32.xlu0 %v882, 32
    %v991 = vpop.permute.xlu0 %990
    %992 = vrot.lane.b32.xlu0 %v883, 32
    %v993 = vpop.permute.xlu0 %992
    %994 = vrot.lane.b32.xlu0 %v884, 32
    %v995 = vpop.permute.xlu0 %994
    %996 = vrot.lane.b32.xlu0 %v885, 32
    %v997 = vpop.permute.xlu0 %996
    %v1006 = vmul.f32 %v974, %v983
    %v1007 = vmul.f32 %v975, %v985
    %v1008 = vmul.f32 %v976, %v987
    %v1009 = vmul.f32 %v977, %v989
    %v1010 = vmul.f32 %v978, %v991
    %v1011 = vmul.f32 %v979, %v993
    %v1012 = vmul.f32 %v980, %v995
    %v1013 = vmul.f32 %v981, %v997
    %v1014 = vld [vmem:[#allocation2 + $0x40] sm:$0xff]
    %v1015 = vld [vmem:[#allocation2 + $0x48] sm:$0xff]
    %v1016 = vld [vmem:[#allocation2 + $0x50] sm:$0xff]
    %v1017 = vld [vmem:[#allocation2 + $0x58] sm:$0xff]
    %v1018 = vld [vmem:[#allocation2 + $0x60] sm:$0xff]
    %v1019 = vld [vmem:[#allocation2 + $0x68] sm:$0xff]
    %v1020 = vld [vmem:[#allocation2 + $0x70] sm:$0xff]
    %v1021 = vld [vmem:[#allocation2 + $0x78] sm:$0xff]
    %v1023 = vsel %vm745, %v1006, 0
    %v1026 = vsel %vm745, %v1007, 0
    %v1029 = vsel %vm745, %v1008, 0
    %v1032 = vsel %vm745, %v1009, 0
    %v1035 = vsel %vm745, %v1010, 0
    %v1038 = vsel %vm745, %v1011, 0
    %v1041 = vsel %vm745, %v1012, 0
    %v1044 = vsel %vm745, %v1013, 0
    %1046 = vmatprep.subr.mxu0 0.0
    %1047 = vmatpush1.msra.mxu0 %v18
    %1048 = vmatprep.subr.mxu0 0.0
    %1049 = vmatpush1.msra.mxu0 %v19
    %1050 = vmatprep.subr.mxu0 0.0
    %1051 = vmatpush1.msra.mxu0 %v20
    %1052 = vmatprep.subr.mxu0 0.0
    %1053 = vmatpush1.msra.mxu0 %v21
    %1054 = vmatprep.subr.mxu0 0.0
    %1055 = vmatpush1.msra.mxu0 0.0
    %1056 = vmatprep.subr.mxu0 0.0
    %1057 = vmatpush1.msra.mxu0 0.0
    %1058 = vmatprep.subr.mxu0 0.0
    %1059 = vmatpush1.msra.mxu0 0.0
    %1060 = vmatprep.subr.mxu0 0.0
    %1061 = vmatpush1.msra.mxu0 0.0
    %1062 = vmatprep.subr.mxu0 0.0
    %1063 = vmatpush1.msra.mxu0 0.0
    %1064 = vmatprep.subr.mxu0 0.0
    %1065 = vmatpush1.msra.mxu0 0.0
    %1066 = vmatprep.subr.mxu0 0.0
    %1067 = vmatpush1.msra.mxu0 0.0
    %1068 = vmatprep.subr.mxu0 0.0
    %1069 = vmatpush1.msra.mxu0 0.0
    %1070 = vmatprep.subr.mxu0 0.0
    %1071 = vmatpush1.msra.mxu0 0.0
    %1072 = vmatprep.subr.mxu0 0.0
    %1073 = vmatpush1.msra.mxu0 0.0
    %1074 = vmatprep.subr.mxu0 0.0
    %1075 = vmatpush1.msra.mxu0 0.0
    %1076 = vmatprep.subr.mxu0 0.0
    %1077 = vmatpush1.msra.mxu0 0.0
    %1078 = vmatprep.subr.mxu0 0.0
    %1079 = vmatpush1.msra.mxu0 0.0
    %1080 = vmatprep.subr.mxu0 0.0
    %1081 = vmatpush1.msra.mxu0 0.0
    %1082 = vmatprep.subr.mxu0 0.0
    %1083 = vmatpush1.msra.mxu0 0.0
    %1084 = vmatprep.subr.mxu0 0.0
    %1085 = vmatpush1.msra.mxu0 0.0
    %1086 = vmatprep.subr.mxu0 0.0
    %1087 = vmatpush1.msra.mxu0 0.0
    %1088 = vmatprep.subr.mxu0 0.0
    %1089 = vmatpush1.msra.mxu0 0.0
    %1090 = vmatprep.subr.mxu0 0.0
    %1091 = vmatpush1.msra.mxu0 0.0
    %1092 = vmatprep.subr.mxu0 0.0
    %1093 = vmatpush1.msra.mxu0 0.0
    %1094 = vmatprep.subr.mxu0 0.0
    %1095 = vmatpush1.msra.mxu0 0.0
    %1096 = vmatprep.subr.mxu0 0.0
    %1097 = vmatpush1.msra.mxu0 0.0
    %1098 = vmatprep.subr.mxu0 0.0
    %1099 = vmatpush1.msra.mxu0 0.0
    %1100 = vmatprep.subr.mxu0 0.0
    %1101 = vmatpush1.msra.mxu0 0.0
    %1102 = vmatprep.subr.mxu0 0.0
    %1103 = vmatpush1.msra.mxu0 0.0
    %1104 = vmatprep.subr.mxu0 0.0
    %1105 = vmatpush1.msra.mxu0 0.0
    %1106 = vmatprep.subr.mxu0 0.0
    %1107 = vmatpush1.msra.mxu0 0.0
    %1108 = vmatprep.subr.mxu0 0.0
    %1109 = vmatpush1.msra.mxu0 0.0
    %1110 = vmatprep.mubr.f32.mxu0 0.0
    %1111 = vmatmul.mubr.f32.gmra.mrb[0].mxu0 %v1023
    %v1112 = vpop.f32.mrb[0].mxu0
    %v1113 = vadd.f32 0.0, %v1112
    %v1114 = vpop.f32.mrb[0].mxu0
    %1115 = vmatprep.mubr.f32.mxu0 0.0
    %1116 = vmatmul.mubr.f32.gmra.mrb[0].mxu0 %v1026
    %v1117 = vpop.f32.mrb[0].mxu0
    %v1118 = vadd.f32 0.0, %v1117
    %v1119 = vpop.f32.mrb[0].mxu0
    %1120 = vmatprep.mubr.f32.mxu0 0.0
    %1121 = vmatmul.mubr.f32.gmra.mrb[0].mxu0 %v1029
    %v1122 = vpop.f32.mrb[0].mxu0
    %v1123 = vadd.f32 0.0, %v1122
    %v1124 = vpop.f32.mrb[0].mxu0
    %1125 = vmatprep.mubr.f32.mxu0 0.0
    %1126 = vmatmul.mubr.f32.gmra.mrb[0].mxu0 %v1032
    %v1127 = vpop.f32.mrb[0].mxu0
    %v1128 = vadd.f32 0.0, %v1127
    %v1129 = vpop.f32.mrb[0].mxu0
    %1130 = vmatprep.mubr.f32.mxu0 0.0
    %1131 = vmatmul.mubr.f32.gmra.mrb[0].mxu0 %v1035
    %v1132 = vpop.f32.mrb[0].mxu0
    %v1133 = vadd.f32 0.0, %v1132
    %v1134 = vpop.f32.mrb[0].mxu0
    %1135 = vmatprep.mubr.f32.mxu0 0.0
    %1136 = vmatmul.mubr.f32.gmra.mrb[0].mxu0 %v1038
    %v1137 = vpop.f32.mrb[0].mxu0
    %v1138 = vadd.f32 0.0, %v1137
    %v1139 = vpop.f32.mrb[0].mxu0
    %1140 = vmatprep.mubr.f32.mxu0 0.0
    %1141 = vmatmul.mubr.f32.gmra.mrb[0].mxu0 %v1041
    %v1142 = vpop.f32.mrb[0].mxu0
    %v1143 = vadd.f32 0.0, %v1142
    %v1144 = vpop.f32.mrb[0].mxu0
    %1145 = vmatprep.mubr.f32.mxu0 0.0
    %1146 = vmatmul.mubr.f32.gmra.mrb[0].mxu0 %v1044
    %v1147 = vpop.f32.mrb[0].mxu0
    %v1148 = vadd.f32 0.0, %v1147
    %v1149 = vpop.f32.mrb[0].mxu0
    %1150 = vdwg.mxu0
    %v1151 = vadd.f32 %v1014, %v1113
    %v1152 = vadd.f32 %v1015, %v1118
    %v1153 = vadd.f32 %v1016, %v1123
    %v1154 = vadd.f32 %v1017, %v1128
    %v1155 = vadd.f32 %v1018, %v1133
    %v1156 = vadd.f32 %v1019, %v1138
    %v1157 = vadd.f32 %v1020, %v1143
    %v1158 = vadd.f32 %v1021, %v1148
    %v1159 = vtanh.pop %v1151
    %v1160 = vtanh.pop %v1152
    %v1161 = vtanh.pop %v1153
    %v1162 = vtanh.pop %v1154
    %v1163 = vtanh.pop %v1155
    %v1164 = vtanh.pop %v1156
    %v1165 = vtanh.pop %v1157
    %v1166 = vtanh.pop %v1158
    %v1167 = vmul.f32 %v1159, 0.5
    %v1168 = vmul.f32 %v1160, 0.5
    %v1169 = vmul.f32 %v1161, 0.5
    %v1170 = vmul.f32 %v1162, 0.5
    %v1171 = vmul.f32 %v1163, 0.5
    %v1172 = vmul.f32 %v1164, 0.5
    %v1173 = vmul.f32 %v1165, 0.5
    %v1174 = vmul.f32 %v1166, 0.5
    %v1175 = vadd.f32 %v1167, 0.5
    %v1176 = vadd.f32 %v1168, 0.5
    %v1177 = vadd.f32 %v1169, 0.5
    %v1178 = vadd.f32 %v1170, 0.5
    %v1179 = vadd.f32 %v1171, 0.5
    %v1180 = vadd.f32 %v1172, 0.5
    %v1181 = vadd.f32 %v1173, 0.5
    %v1182 = vadd.f32 %v1174, 0.5
    %1191 = vrot.lane.b32.xlu0 %v1175, 96
    %v1192 = vpop.permute.xlu0 %1191
    %1193 = vrot.lane.b32.xlu0 %v1176, 96
    %v1194 = vpop.permute.xlu0 %1193
    %1195 = vrot.lane.b32.xlu0 %v1177, 96
    %v1196 = vpop.permute.xlu0 %1195
    %1197 = vrot.lane.b32.xlu0 %v1178, 96
    %v1198 = vpop.permute.xlu0 %1197
    %1199 = vrot.lane.b32.xlu0 %v1179, 96
    %v1200 = vpop.permute.xlu0 %1199
    %1201 = vrot.lane.b32.xlu0 %v1180, 96
    %v1202 = vpop.permute.xlu0 %1201
    %1203 = vrot.lane.b32.xlu0 %v1181, 96
    %v1204 = vpop.permute.xlu0 %1203
    %1205 = vrot.lane.b32.xlu0 %v1182, 96
    %v1206 = vpop.permute.xlu0 %1205
    %v1215 = vmul.f32 %v1159, %v1192
    %v1216 = vmul.f32 %v1160, %v1194
    %v1217 = vmul.f32 %v1161, %v1196
    %v1218 = vmul.f32 %v1162, %v1198
    %v1219 = vmul.f32 %v1163, %v1200
    %v1220 = vmul.f32 %v1164, %v1202
    %v1221 = vmul.f32 %v1165, %v1204
    %v1222 = vmul.f32 %v1166, %v1206
    %1223 = vrot.lane.b32.xlu0 %v1175, 64
    %v1224 = vpop.permute.xlu0 %1223
    %1225 = vrot.lane.b32.xlu0 %v1176, 64
    %v1226 = vpop.permute.xlu0 %1225
    %1227 = vrot.lane.b32.xlu0 %v1177, 64
    %v1228 = vpop.permute.xlu0 %1227
    %1229 = vrot.lane.b32.xlu0 %v1178, 64
    %v1230 = vpop.permute.xlu0 %1229
    %1231 = vrot.lane.b32.xlu0 %v1179, 64
    %v1232 = vpop.permute.xlu0 %1231
    %1233 = vrot.lane.b32.xlu0 %v1180, 64
    %v1234 = vpop.permute.xlu0 %1233
    %1235 = vrot.lane.b32.xlu0 %v1181, 64
    %v1236 = vpop.permute.xlu0 %1235
    %1237 = vrot.lane.b32.xlu0 %v1182, 64
    %v1238 = vpop.permute.xlu0 %1237
    %v1247 = vmul.f32 %v966, %v1224
    %v1248 = vmul.f32 %v967, %v1226
    %v1249 = vmul.f32 %v968, %v1228
    %v1250 = vmul.f32 %v969, %v1230
    %v1251 = vmul.f32 %v970, %v1232
    %v1252 = vmul.f32 %v971, %v1234
    %v1253 = vmul.f32 %v972, %v1236
    %v1254 = vmul.f32 %v973, %v1238
    %v1255 = vadd.f32 %v1215, %v1247
    %v1256 = vadd.f32 %v1216, %v1248
    %v1257 = vadd.f32 %v1217, %v1249
    %v1258 = vadd.f32 %v1218, %v1250
    %v1259 = vadd.f32 %v1219, %v1251
    %v1260 = vadd.f32 %v1220, %v1252
    %v1261 = vadd.f32 %v1221, %v1253
    %v1262 = vadd.f32 %v1222, %v1254
    %v1263 = vtanh.pop %v1255
    %v1264 = vtanh.pop %v1256
    %v1265 = vtanh.pop %v1257
    %v1266 = vtanh.pop %v1258
    %v1267 = vtanh.pop %v1259
    %v1268 = vtanh.pop %v1260
    %v1269 = vtanh.pop %v1261
    %v1270 = vtanh.pop %v1262
    %1271 = vrot.lane.b32.xlu0 %v1175, 32
    %v1272 = vpop.permute.xlu0 %1271
    %1273 = vrot.lane.b32.xlu0 %v1176, 32
    %v1274 = vpop.permute.xlu0 %1273
    %1275 = vrot.lane.b32.xlu0 %v1177, 32
    %v1276 = vpop.permute.xlu0 %1275
    %1277 = vrot.lane.b32.xlu0 %v1178, 32
    %v1278 = vpop.permute.xlu0 %1277
    %1279 = vrot.lane.b32.xlu0 %v1179, 32
    %v1280 = vpop.permute.xlu0 %1279
    %1281 = vrot.lane.b32.xlu0 %v1180, 32
    %v1282 = vpop.permute.xlu0 %1281
    %1283 = vrot.lane.b32.xlu0 %v1181, 32
    %v1284 = vpop.permute.xlu0 %1283
    %1285 = vrot.lane.b32.xlu0 %v1182, 32
    %v1286 = vpop.permute.xlu0 %1285
    %v1295 = vmul.f32 %v1263, %v1272
    %v1296 = vmul.f32 %v1264, %v1274
    %v1297 = vmul.f32 %v1265, %v1276
    %v1298 = vmul.f32 %v1266, %v1278
    %v1299 = vmul.f32 %v1267, %v1280
    %v1300 = vmul.f32 %v1268, %v1282
    %v1301 = vmul.f32 %v1269, %v1284
    %v1302 = vmul.f32 %v1270, %v1286
    %v1303 = vld [vmem:[#allocation2 + $0x80] sm:$0xff]
    %v1304 = vld [vmem:[#allocation2 + $0x88] sm:$0xff]
    %v1305 = vld [vmem:[#allocation2 + $0x90] sm:$0xff]
    %v1306 = vld [vmem:[#allocation2 + $0x98] sm:$0xff]
    %v1307 = vld [vmem:[#allocation2 + $0xa0] sm:$0xff]
    %v1308 = vld [vmem:[#allocation2 + $0xa8] sm:$0xff]
    %v1309 = vld [vmem:[#allocation2 + $0xb0] sm:$0xff]
    %v1310 = vld [vmem:[#allocation2 + $0xb8] sm:$0xff]
    %v1312 = vsel %vm745, %v1295, 0
    %v1315 = vsel %vm745, %v1296, 0
    %v1318 = vsel %vm745, %v1297, 0
    %v1321 = vsel %vm745, %v1298, 0
    %v1324 = vsel %vm745, %v1299, 0
    %v1327 = vsel %vm745, %v1300, 0
    %v1330 = vsel %vm745, %v1301, 0
    %v1333 = vsel %vm745, %v1302, 0
    %1335 = vmatprep.subr.mxu0 0.0
    %1336 = vmatpush1.msra.mxu0 %v18
    %1337 = vmatprep.subr.mxu0 0.0
    %1338 = vmatpush1.msra.mxu0 %v19
    %1339 = vmatprep.subr.mxu0 0.0
    %1340 = vmatpush1.msra.mxu0 %v20
    %1341 = vmatprep.subr.mxu0 0.0
    %1342 = vmatpush1.msra.mxu0 %v21
    %1343 = vmatprep.subr.mxu0 0.0
    %1344 = vmatpush1.msra.mxu0 0.0
    %1345 = vmatprep.subr.mxu0 0.0
    %1346 = vmatpush1.msra.mxu0 0.0
    %1347 = vmatprep.subr.mxu0 0.0
    %1348 = vmatpush1.msra.mxu0 0.0
    %1349 = vmatprep.subr.mxu0 0.0
    %1350 = vmatpush1.msra.mxu0 0.0
    %1351 = vmatprep.subr.mxu0 0.0
    %1352 = vmatpush1.msra.mxu0 0.0
    %1353 = vmatprep.subr.mxu0 0.0
    %1354 = vmatpush1.msra.mxu0 0.0
    %1355 = vmatprep.subr.mxu0 0.0
    %1356 = vmatpush1.msra.mxu0 0.0
    %1357 = vmatprep.subr.mxu0 0.0
    %1358 = vmatpush1.msra.mxu0 0.0
    %1359 = vmatprep.subr.mxu0 0.0
    %1360 = vmatpush1.msra.mxu0 0.0
    %1361 = vmatprep.subr.mxu0 0.0
    %1362 = vmatpush1.msra.mxu0 0.0
    %1363 = vmatprep.subr.mxu0 0.0
    %1364 = vmatpush1.msra.mxu0 0.0
    %1365 = vmatprep.subr.mxu0 0.0
    %1366 = vmatpush1.msra.mxu0 0.0
    %1367 = vmatprep.subr.mxu0 0.0
    %1368 = vmatpush1.msra.mxu0 0.0
    %1369 = vmatprep.subr.mxu0 0.0
    %1370 = vmatpush1.msra.mxu0 0.0
    %1371 = vmatprep.subr.mxu0 0.0
    %1372 = vmatpush1.msra.mxu0 0.0
    %1373 = vmatprep.subr.mxu0 0.0
    %1374 = vmatpush1.msra.mxu0 0.0
    %1375 = vmatprep.subr.mxu0 0.0
    %1376 = vmatpush1.msra.mxu0 0.0
    %1377 = vmatprep.subr.mxu0 0.0
    %1378 = vmatpush1.msra.mxu0 0.0
    %1379 = vmatprep.subr.mxu0 0.0
    %1380 = vmatpush1.msra.mxu0 0.0
    %1381 = vmatprep.subr.mxu0 0.0
    %1382 = vmatpush1.msra.mxu0 0.0
    %1383 = vmatprep.subr.mxu0 0.0
    %1384 = vmatpush1.msra.mxu0 0.0
    %1385 = vmatprep.subr.mxu0 0.0
    %1386 = vmatpush1.msra.mxu0 0.0
    %1387 = vmatprep.subr.mxu0 0.0
    %1388 = vmatpush1.msra.mxu0 0.0
    %1389 = vmatprep.subr.mxu0 0.0
    %1390 = vmatpush1.msra.mxu0 0.0
    %1391 = vmatprep.subr.mxu0 0.0
    %1392 = vmatpush1.msra.mxu0 0.0
    %1393 = vmatprep.subr.mxu0 0.0
    %1394 = vmatpush1.msra.mxu0 0.0
    %1395 = vmatprep.subr.mxu0 0.0
    %1396 = vmatpush1.msra.mxu0 0.0
    %1397 = vmatprep.subr.mxu0 0.0
    %1398 = vmatpush1.msra.mxu0 0.0
    %1399 = vmatprep.mubr.f32.mxu0 0.0
    %1400 = vmatmul.mubr.f32.gmra.mrb[0].mxu0 %v1312
    %v1401 = vpop.f32.mrb[0].mxu0
    %v1402 = vadd.f32 0.0, %v1401
    %v1403 = vpop.f32.mrb[0].mxu0
    %1404 = vmatprep.mubr.f32.mxu0 0.0
    %1405 = vmatmul.mubr.f32.gmra.mrb[0].mxu0 %v1315
    %v1406 = vpop.f32.mrb[0].mxu0
    %v1407 = vadd.f32 0.0, %v1406
    %v1408 = vpop.f32.mrb[0].mxu0
    %1409 = vmatprep.mubr.f32.mxu0 0.0
    %1410 = vmatmul.mubr.f32.gmra.mrb[0].mxu0 %v1318
    %v1411 = vpop.f32.mrb[0].mxu0
    %v1412 = vadd.f32 0.0, %v1411
    %v1413 = vpop.f32.mrb[0].mxu0
    %1414 = vmatprep.mubr.f32.mxu0 0.0
    %1415 = vmatmul.mubr.f32.gmra.mrb[0].mxu0 %v1321
    %v1416 = vpop.f32.mrb[0].mxu0
    %v1417 = vadd.f32 0.0, %v1416
    %v1418 = vpop.f32.mrb[0].mxu0
    %1419 = vmatprep.mubr.f32.mxu0 0.0
    %1420 = vmatmul.mubr.f32.gmra.mrb[0].mxu0 %v1324
    %v1421 = vpop.f32.mrb[0].mxu0
    %v1422 = vadd.f32 0.0, %v1421
    %v1423 = vpop.f32.mrb[0].mxu0
    %1424 = vmatprep.mubr.f32.mxu0 0.0
    %1425 = vmatmul.mubr.f32.gmra.mrb[0].mxu0 %v1327
    %v1426 = vpop.f32.mrb[0].mxu0
    %v1427 = vadd.f32 0.0, %v1426
    %v1428 = vpop.f32.mrb[0].mxu0
    %1429 = vmatprep.mubr.f32.mxu0 0.0
    %1430 = vmatmul.mubr.f32.gmra.mrb[0].mxu0 %v1330
    %v1431 = vpop.f32.mrb[0].mxu0
    %v1432 = vadd.f32 0.0, %v1431
    %v1433 = vpop.f32.mrb[0].mxu0
    %1434 = vmatprep.mubr.f32.mxu0 0.0
    %1435 = vmatmul.mubr.f32.gmra.mrb[0].mxu0 %v1333
    %v1436 = vpop.f32.mrb[0].mxu0
    %v1437 = vadd.f32 0.0, %v1436
    %v1438 = vpop.f32.mrb[0].mxu0
    %1439 = vdwg.mxu0
    %v1440 = vadd.f32 %v1303, %v1402
    %v1441 = vadd.f32 %v1304, %v1407
    %v1442 = vadd.f32 %v1305, %v1412
    %v1443 = vadd.f32 %v1306, %v1417
    %v1444 = vadd.f32 %v1307, %v1422
    %v1445 = vadd.f32 %v1308, %v1427
    %v1446 = vadd.f32 %v1309, %v1432
    %v1447 = vadd.f32 %v1310, %v1437
    %v1448 = vtanh.pop %v1440
    %v1449 = vtanh.pop %v1441
    %v1450 = vtanh.pop %v1442
    %v1451 = vtanh.pop %v1443
    %v1452 = vtanh.pop %v1444
    %v1453 = vtanh.pop %v1445
    %v1454 = vtanh.pop %v1446
    %v1455 = vtanh.pop %v1447
    %v1456 = vmul.f32 %v1448, 0.5
    %v1457 = vmul.f32 %v1449, 0.5
    %v1458 = vmul.f32 %v1450, 0.5
    %v1459 = vmul.f32 %v1451, 0.5
    %v1460 = vmul.f32 %v1452, 0.5
    %v1461 = vmul.f32 %v1453, 0.5
    %v1462 = vmul.f32 %v1454, 0.5
    %v1463 = vmul.f32 %v1455, 0.5
    %v1464 = vadd.f32 %v1456, 0.5
    %v1465 = vadd.f32 %v1457, 0.5
    %v1466 = vadd.f32 %v1458, 0.5
    %v1467 = vadd.f32 %v1459, 0.5
    %v1468 = vadd.f32 %v1460, 0.5
    %v1469 = vadd.f32 %v1461, 0.5
    %v1470 = vadd.f32 %v1462, 0.5
    %v1471 = vadd.f32 %v1463, 0.5
    %1480 = vrot.lane.b32.xlu0 %v1464, 96
    %v1481 = vpop.permute.xlu0 %1480
    %1482 = vrot.lane.b32.xlu0 %v1465, 96
    %v1483 = vpop.permute.xlu0 %1482
    %1484 = vrot.lane.b32.xlu0 %v1466, 96
    %v1485 = vpop.permute.xlu0 %1484
    %1486 = vrot.lane.b32.xlu0 %v1467, 96
    %v1487 = vpop.permute.xlu0 %1486
    %1488 = vrot.lane.b32.xlu0 %v1468, 96
    %v1489 = vpop.permute.xlu0 %1488
    %1490 = vrot.lane.b32.xlu0 %v1469, 96
    %v1491 = vpop.permute.xlu0 %1490
    %1492 = vrot.lane.b32.xlu0 %v1470, 96
    %v1493 = vpop.permute.xlu0 %1492
    %1494 = vrot.lane.b32.xlu0 %v1471, 96
    %v1495 = vpop.permute.xlu0 %1494
    %v1504 = vmul.f32 %v1448, %v1481
    %v1505 = vmul.f32 %v1449, %v1483
    %v1506 = vmul.f32 %v1450, %v1485
    %v1507 = vmul.f32 %v1451, %v1487
    %v1508 = vmul.f32 %v1452, %v1489
    %v1509 = vmul.f32 %v1453, %v1491
    %v1510 = vmul.f32 %v1454, %v1493
    %v1511 = vmul.f32 %v1455, %v1495
    %1512 = vrot.lane.b32.xlu0 %v1464, 64
    %v1513 = vpop.permute.xlu0 %1512
    %1514 = vrot.lane.b32.xlu0 %v1465, 64
    %v1515 = vpop.permute.xlu0 %1514
    %1516 = vrot.lane.b32.xlu0 %v1466, 64
    %v1517 = vpop.permute.xlu0 %1516
    %1518 = vrot.lane.b32.xlu0 %v1467, 64
    %v1519 = vpop.permute.xlu0 %1518
    %1520 = vrot.lane.b32.xlu0 %v1468, 64
    %v1521 = vpop.permute.xlu0 %1520
    %1522 = vrot.lane.b32.xlu0 %v1469, 64
    %v1523 = vpop.permute.xlu0 %1522
    %1524 = vrot.lane.b32.xlu0 %v1470, 64
    %v1525 = vpop.permute.xlu0 %1524
    %1526 = vrot.lane.b32.xlu0 %v1471, 64
    %v1527 = vpop.permute.xlu0 %1526
    %v1536 = vmul.f32 %v1255, %v1513
    %v1537 = vmul.f32 %v1256, %v1515
    %v1538 = vmul.f32 %v1257, %v1517
    %v1539 = vmul.f32 %v1258, %v1519
    %v1540 = vmul.f32 %v1259, %v1521
    %v1541 = vmul.f32 %v1260, %v1523
    %v1542 = vmul.f32 %v1261, %v1525
    %v1543 = vmul.f32 %v1262, %v1527
    %v1544 = vadd.f32 %v1504, %v1536
    %v1545 = vadd.f32 %v1505, %v1537
    %v1546 = vadd.f32 %v1506, %v1538
    %v1547 = vadd.f32 %v1507, %v1539
    %v1548 = vadd.f32 %v1508, %v1540
    %v1549 = vadd.f32 %v1509, %v1541
    %v1550 = vadd.f32 %v1510, %v1542
    %v1551 = vadd.f32 %v1511, %v1543
    %v1552 = vtanh.pop %v1544
    %v1553 = vtanh.pop %v1545
    %v1554 = vtanh.pop %v1546
    %v1555 = vtanh.pop %v1547
    %v1556 = vtanh.pop %v1548
    %v1557 = vtanh.pop %v1549
    %v1558 = vtanh.pop %v1550
    %v1559 = vtanh.pop %v1551
    %1560 = vrot.lane.b32.xlu0 %v1464, 32
    %v1561 = vpop.permute.xlu0 %1560
    %1562 = vrot.lane.b32.xlu0 %v1465, 32
    %v1563 = vpop.permute.xlu0 %1562
    %1564 = vrot.lane.b32.xlu0 %v1466, 32
    %v1565 = vpop.permute.xlu0 %1564
    %1566 = vrot.lane.b32.xlu0 %v1467, 32
    %v1567 = vpop.permute.xlu0 %1566
    %1568 = vrot.lane.b32.xlu0 %v1468, 32
    %v1569 = vpop.permute.xlu0 %1568
    %1570 = vrot.lane.b32.xlu0 %v1469, 32
    %v1571 = vpop.permute.xlu0 %1570
    %1572 = vrot.lane.b32.xlu0 %v1470, 32
    %v1573 = vpop.permute.xlu0 %1572
    %1574 = vrot.lane.b32.xlu0 %v1471, 32
    %v1575 = vpop.permute.xlu0 %1574
    %v1584 = vmul.f32 %v1552, %v1561
    %v1585 = vmul.f32 %v1553, %v1563
    %v1586 = vmul.f32 %v1554, %v1565
    %v1587 = vmul.f32 %v1555, %v1567
    %v1588 = vmul.f32 %v1556, %v1569
    %v1589 = vmul.f32 %v1557, %v1571
    %v1590 = vmul.f32 %v1558, %v1573
    %v1591 = vmul.f32 %v1559, %v1575
    %v1592 = vld [vmem:[#allocation2 + $0xc0] sm:$0xff]
    %v1593 = vld [vmem:[#allocation2 + $0xc8] sm:$0xff]
    %v1594 = vld [vmem:[#allocation2 + $0xd0] sm:$0xff]
    %v1595 = vld [vmem:[#allocation2 + $0xd8] sm:$0xff]
    %v1596 = vld [vmem:[#allocation2 + $0xe0] sm:$0xff]
    %v1597 = vld [vmem:[#allocation2 + $0xe8] sm:$0xff]
    %v1598 = vld [vmem:[#allocation2 + $0xf0] sm:$0xff]
    %v1599 = vld [vmem:[#allocation2 + $0xf8] sm:$0xff]
    %v1601 = vsel %vm745, %v1584, 0
    %v1604 = vsel %vm745, %v1585, 0
    %v1607 = vsel %vm745, %v1586, 0
    %v1610 = vsel %vm745, %v1587, 0
    %v1613 = vsel %vm745, %v1588, 0
    %v1616 = vsel %vm745, %v1589, 0
    %v1619 = vsel %vm745, %v1590, 0
    %v1622 = vsel %vm745, %v1591, 0
    %1624 = vmatprep.subr.mxu0 0.0
    %1625 = vmatpush1.msra.mxu0 %v18
    %1626 = vmatprep.subr.mxu0 0.0
    %1627 = vmatpush1.msra.mxu0 %v19
    %1628 = vmatprep.subr.mxu0 0.0
    %1629 = vmatpush1.msra.mxu0 %v20
    %1630 = vmatprep.subr.mxu0 0.0
    %1631 = vmatpush1.msra.mxu0 %v21
    %1632 = vmatprep.subr.mxu0 0.0
    %1633 = vmatpush1.msra.mxu0 0.0
    %1634 = vmatprep.subr.mxu0 0.0
    %1635 = vmatpush1.msra.mxu0 0.0
    %1636 = vmatprep.subr.mxu0 0.0
    %1637 = vmatpush1.msra.mxu0 0.0
    %1638 = vmatprep.subr.mxu0 0.0
    %1639 = vmatpush1.msra.mxu0 0.0
    %1640 = vmatprep.subr.mxu0 0.0
    %1641 = vmatpush1.msra.mxu0 0.0
    %1642 = vmatprep.subr.mxu0 0.0
    %1643 = vmatpush1.msra.mxu0 0.0
    %1644 = vmatprep.subr.mxu0 0.0
    %1645 = vmatpush1.msra.mxu0 0.0
    %1646 = vmatprep.subr.mxu0 0.0
    %1647 = vmatpush1.msra.mxu0 0.0
    %1648 = vmatprep.subr.mxu0 0.0
    %1649 = vmatpush1.msra.mxu0 0.0
    %1650 = vmatprep.subr.mxu0 0.0
    %1651 = vmatpush1.msra.mxu0 0.0
    %1652 = vmatprep.subr.mxu0 0.0
    %1653 = vmatpush1.msra.mxu0 0.0
    %1654 = vmatprep.subr.mxu0 0.0
    %1655 = vmatpush1.msra.mxu0 0.0
    %1656 = vmatprep.subr.mxu0 0.0
    %1657 = vmatpush1.msra.mxu0 0.0
    %1658 = vmatprep.subr.mxu0 0.0
    %1659 = vmatpush1.msra.mxu0 0.0
    %1660 = vmatprep.subr.mxu0 0.0
    %1661 = vmatpush1.msra.mxu0 0.0
    %1662 = vmatprep.subr.mxu0 0.0
    %1663 = vmatpush1.msra.mxu0 0.0
    %1664 = vmatprep.subr.mxu0 0.0
    %1665 = vmatpush1.msra.mxu0 0.0
    %1666 = vmatprep.subr.mxu0 0.0
    %1667 = vmatpush1.msra.mxu0 0.0
    %1668 = vmatprep.subr.mxu0 0.0
    %1669 = vmatpush1.msra.mxu0 0.0
    %1670 = vmatprep.subr.mxu0 0.0
    %1671 = vmatpush1.msra.mxu0 0.0
    %1672 = vmatprep.subr.mxu0 0.0
    %1673 = vmatpush1.msra.mxu0 0.0
    %1674 = vmatprep.subr.mxu0 0.0
    %1675 = vmatpush1.msra.mxu0 0.0
    %1676 = vmatprep.subr.mxu0 0.0
    %1677 = vmatpush1.msra.mxu0 0.0
    %1678 = vmatprep.subr.mxu0 0.0
    %1679 = vmatpush1.msra.mxu0 0.0
    %1680 = vmatprep.subr.mxu0 0.0
    %1681 = vmatpush1.msra.mxu0 0.0
    %1682 = vmatprep.subr.mxu0 0.0
    %1683 = vmatpush1.msra.mxu0 0.0
    %1684 = vmatprep.subr.mxu0 0.0
    %1685 = vmatpush1.msra.mxu0 0.0
    %1686 = vmatprep.subr.mxu0 0.0
    %1687 = vmatpush1.msra.mxu0 0.0
    %1688 = vmatprep.mubr.f32.mxu0 0.0
    %1689 = vmatmul.mubr.f32.gmra.mrb[0].mxu0 %v1601
    %v1690 = vpop.f32.mrb[0].mxu0
    %v1691 = vadd.f32 0.0, %v1690
    %v1692 = vpop.f32.mrb[0].mxu0
    %1693 = vmatprep.mubr.f32.mxu0 0.0
    %1694 = vmatmul.mubr.f32.gmra.mrb[0].mxu0 %v1604
    %v1695 = vpop.f32.mrb[0].mxu0
    %v1696 = vadd.f32 0.0, %v1695
    %v1697 = vpop.f32.mrb[0].mxu0
    %1698 = vmatprep.mubr.f32.mxu0 0.0
    %1699 = vmatmul.mubr.f32.gmra.mrb[0].mxu0 %v1607
    %v1700 = vpop.f32.mrb[0].mxu0
    %v1701 = vadd.f32 0.0, %v1700
    %v1702 = vpop.f32.mrb[0].mxu0
    %1703 = vmatprep.mubr.f32.mxu0 0.0
    %1704 = vmatmul.mubr.f32.gmra.mrb[0].mxu0 %v1610
    %v1705 = vpop.f32.mrb[0].mxu0
    %v1706 = vadd.f32 0.0, %v1705
    %v1707 = vpop.f32.mrb[0].mxu0
    %1708 = vmatprep.mubr.f32.mxu0 0.0
    %1709 = vmatmul.mubr.f32.gmra.mrb[0].mxu0 %v1613
    %v1710 = vpop.f32.mrb[0].mxu0
    %v1711 = vadd.f32 0.0, %v1710
    %v1712 = vpop.f32.mrb[0].mxu0
    %1713 = vmatprep.mubr.f32.mxu0 0.0
    %1714 = vmatmul.mubr.f32.gmra.mrb[0].mxu0 %v1616
    %v1715 = vpop.f32.mrb[0].mxu0
    %v1716 = vadd.f32 0.0, %v1715
    %v1717 = vpop.f32.mrb[0].mxu0
    %1718 = vmatprep.mubr.f32.mxu0 0.0
    %1719 = vmatmul.mubr.f32.gmra.mrb[0].mxu0 %v1619
    %v1720 = vpop.f32.mrb[0].mxu0
    %v1721 = vadd.f32 0.0, %v1720
    %v1722 = vpop.f32.mrb[0].mxu0
    %1723 = vmatprep.mubr.f32.mxu0 0.0
    %1724 = vmatmul.mubr.f32.gmra.mrb[0].mxu0 %v1622
    %v1725 = vpop.f32.mrb[0].mxu0
    %v1726 = vadd.f32 0.0, %v1725
    %v1727 = vpop.f32.mrb[0].mxu0
    %1728 = vdwg.mxu0
    %v1729 = vadd.f32 %v1592, %v1691
    %v1730 = vadd.f32 %v1593, %v1696
    %v1731 = vadd.f32 %v1594, %v1701
    %v1732 = vadd.f32 %v1595, %v1706
    %v1733 = vadd.f32 %v1596, %v1711
    %v1734 = vadd.f32 %v1597, %v1716
    %v1735 = vadd.f32 %v1598, %v1721
    %v1736 = vadd.f32 %v1599, %v1726
    %v1737 = vtanh.pop %v1729
    %v1738 = vtanh.pop %v1730
    %v1739 = vtanh.pop %v1731
    %v1740 = vtanh.pop %v1732
    %v1741 = vtanh.pop %v1733
    %v1742 = vtanh.pop %v1734
    %v1743 = vtanh.pop %v1735
    %v1744 = vtanh.pop %v1736
    %v1745 = vmul.f32 %v1737, 0.5
    %v1746 = vmul.f32 %v1738, 0.5
    %v1747 = vmul.f32 %v1739, 0.5
    %v1748 = vmul.f32 %v1740, 0.5
    %v1749 = vmul.f32 %v1741, 0.5
    %v1750 = vmul.f32 %v1742, 0.5
    %v1751 = vmul.f32 %v1743, 0.5
    %v1752 = vmul.f32 %v1744, 0.5
    %v1753 = vadd.f32 %v1745, 0.5
    %v1754 = vadd.f32 %v1746, 0.5
    %v1755 = vadd.f32 %v1747, 0.5
    %v1756 = vadd.f32 %v1748, 0.5
    %v1757 = vadd.f32 %v1749, 0.5
    %v1758 = vadd.f32 %v1750, 0.5
    %v1759 = vadd.f32 %v1751, 0.5
    %v1760 = vadd.f32 %v1752, 0.5
    %1769 = vrot.lane.b32.xlu0 %v1753, 96
    %v1770 = vpop.permute.xlu0 %1769
    %1771 = vrot.lane.b32.xlu0 %v1754, 96
    %v1772 = vpop.permute.xlu0 %1771
    %1773 = vrot.lane.b32.xlu0 %v1755, 96
    %v1774 = vpop.permute.xlu0 %1773
    %1775 = vrot.lane.b32.xlu0 %v1756, 96
    %v1776 = vpop.permute.xlu0 %1775
    %1777 = vrot.lane.b32.xlu0 %v1757, 96
    %v1778 = vpop.permute.xlu0 %1777
    %1779 = vrot.lane.b32.xlu0 %v1758, 96
    %v1780 = vpop.permute.xlu0 %1779
    %1781 = vrot.lane.b32.xlu0 %v1759, 96
    %v1782 = vpop.permute.xlu0 %1781
    %1783 = vrot.lane.b32.xlu0 %v1760, 96
    %v1784 = vpop.permute.xlu0 %1783
    %v1793 = vmul.f32 %v1737, %v1770
    %v1794 = vmul.f32 %v1738, %v1772
    %v1795 = vmul.f32 %v1739, %v1774
    %v1796 = vmul.f32 %v1740, %v1776
    %v1797 = vmul.f32 %v1741, %v1778
    %v1798 = vmul.f32 %v1742, %v1780
    %v1799 = vmul.f32 %v1743, %v1782
    %v1800 = vmul.f32 %v1744, %v1784
    %1801 = vrot.lane.b32.xlu0 %v1753, 64
    %v1802 = vpop.permute.xlu0 %1801
    %1803 = vrot.lane.b32.xlu0 %v1754, 64
    %v1804 = vpop.permute.xlu0 %1803
    %1805 = vrot.lane.b32.xlu0 %v1755, 64
    %v1806 = vpop.permute.xlu0 %1805
    %1807 = vrot.lane.b32.xlu0 %v1756, 64
    %v1808 = vpop.permute.xlu0 %1807
    %1809 = vrot.lane.b32.xlu0 %v1757, 64
    %v1810 = vpop.permute.xlu0 %1809
    %1811 = vrot.lane.b32.xlu0 %v1758, 64
    %v1812 = vpop.permute.xlu0 %1811
    %1813 = vrot.lane.b32.xlu0 %v1759, 64
    %v1814 = vpop.permute.xlu0 %1813
    %1815 = vrot.lane.b32.xlu0 %v1760, 64
    %v1816 = vpop.permute.xlu0 %1815
    %v1825 = vmul.f32 %v1544, %v1802
    %v1826 = vmul.f32 %v1545, %v1804
    %v1827 = vmul.f32 %v1546, %v1806
    %v1828 = vmul.f32 %v1547, %v1808
    %v1829 = vmul.f32 %v1548, %v1810
    %v1830 = vmul.f32 %v1549, %v1812
    %v1831 = vmul.f32 %v1550, %v1814
    %v1832 = vmul.f32 %v1551, %v1816
    %v1833 = vadd.f32 %v1793, %v1825
    %v1834 = vadd.f32 %v1794, %v1826
    %v1835 = vadd.f32 %v1795, %v1827
    %v1836 = vadd.f32 %v1796, %v1828
    %v1837 = vadd.f32 %v1797, %v1829
    %v1838 = vadd.f32 %v1798, %v1830
    %v1839 = vadd.f32 %v1799, %v1831
    %v1840 = vadd.f32 %v1800, %v1832
    %v1841 = vtanh.pop %v1833
    %v1842 = vtanh.pop %v1834
    %v1843 = vtanh.pop %v1835
    %v1844 = vtanh.pop %v1836
    %v1845 = vtanh.pop %v1837
    %v1846 = vtanh.pop %v1838
    %v1847 = vtanh.pop %v1839
    %v1848 = vtanh.pop %v1840
    %1849 = vrot.lane.b32.xlu0 %v1753, 32
    %v1850 = vpop.permute.xlu0 %1849
    %1851 = vrot.lane.b32.xlu0 %v1754, 32
    %v1852 = vpop.permute.xlu0 %1851
    %1853 = vrot.lane.b32.xlu0 %v1755, 32
    %v1854 = vpop.permute.xlu0 %1853
    %1855 = vrot.lane.b32.xlu0 %v1756, 32
    %v1856 = vpop.permute.xlu0 %1855
    %1857 = vrot.lane.b32.xlu0 %v1757, 32
    %v1858 = vpop.permute.xlu0 %1857
    %1859 = vrot.lane.b32.xlu0 %v1758, 32
    %v1860 = vpop.permute.xlu0 %1859
    %1861 = vrot.lane.b32.xlu0 %v1759, 32
    %v1862 = vpop.permute.xlu0 %1861
    %1863 = vrot.lane.b32.xlu0 %v1760, 32
    %v1864 = vpop.permute.xlu0 %1863
    %v1873 = vmul.f32 %v1841, %v1850
    %v1874 = vmul.f32 %v1842, %v1852
    %v1875 = vmul.f32 %v1843, %v1854
    %v1876 = vmul.f32 %v1844, %v1856
    %v1877 = vmul.f32 %v1845, %v1858
    %v1878 = vmul.f32 %v1846, %v1860
    %v1879 = vmul.f32 %v1847, %v1862
    %v1880 = vmul.f32 %v1848, %v1864
    %1881 = vrot.lane.b32.xlu0 %v1295, 32
    %v1882 = vpop.permute.xlu0 %1881
    %1883 = vrot.lane.b32.xlu0 %v1296, 32
    %v1884 = vpop.permute.xlu0 %1883
    %1885 = vrot.lane.b32.xlu0 %v1297, 32
    %v1886 = vpop.permute.xlu0 %1885
    %1887 = vrot.lane.b32.xlu0 %v1298, 32
    %v1888 = vpop.permute.xlu0 %1887
    %1889 = vrot.lane.b32.xlu0 %v1299, 32
    %v1890 = vpop.permute.xlu0 %1889
    %1891 = vrot.lane.b32.xlu0 %v1300, 32
    %v1892 = vpop.permute.xlu0 %1891
    %1893 = vrot.lane.b32.xlu0 %v1301, 32
    %v1894 = vpop.permute.xlu0 %1893
    %1895 = vrot.lane.b32.xlu0 %v1302, 32
    %v1896 = vpop.permute.xlu0 %1895
    %1905 = vrot.lane.b32.xlu0 %v1584, 64
    %v1906 = vpop.permute.xlu0 %1905
    %1907 = vrot.lane.b32.xlu0 %v1585, 64
    %v1908 = vpop.permute.xlu0 %1907
    %1909 = vrot.lane.b32.xlu0 %v1586, 64
    %v1910 = vpop.permute.xlu0 %1909
    %1911 = vrot.lane.b32.xlu0 %v1587, 64
    %v1912 = vpop.permute.xlu0 %1911
    %1913 = vrot.lane.b32.xlu0 %v1588, 64
    %v1914 = vpop.permute.xlu0 %1913
    %1915 = vrot.lane.b32.xlu0 %v1589, 64
    %v1916 = vpop.permute.xlu0 %1915
    %1917 = vrot.lane.b32.xlu0 %v1590, 64
    %v1918 = vpop.permute.xlu0 %1917
    %1919 = vrot.lane.b32.xlu0 %v1591, 64
    %v1920 = vpop.permute.xlu0 %1919
    %1937 = vrot.lane.b32.xlu0 %v1873, 96
    %v1938 = vpop.permute.xlu0 %1937
    %1939 = vrot.lane.b32.xlu0 %v1874, 96
    %v1940 = vpop.permute.xlu0 %1939
    %1941 = vrot.lane.b32.xlu0 %v1875, 96
    %v1942 = vpop.permute.xlu0 %1941
    %1943 = vrot.lane.b32.xlu0 %v1876, 96
    %v1944 = vpop.permute.xlu0 %1943
    %1945 = vrot.lane.b32.xlu0 %v1877, 96
    %v1946 = vpop.permute.xlu0 %1945
    %1947 = vrot.lane.b32.xlu0 %v1878, 96
    %v1948 = vpop.permute.xlu0 %1947
    %1949 = vrot.lane.b32.xlu0 %v1879, 96
    %v1950 = vpop.permute.xlu0 %1949
    %1951 = vrot.lane.b32.xlu0 %v1880, 96
    %v1952 = vpop.permute.xlu0 %1951
    %v1961 = vsel %vm745, %v1006, %v1882
    %v1962 = vsel %vm745, %v1007, %v1884
    %v1963 = vsel %vm745, %v1008, %v1886
    %v1964 = vsel %vm745, %v1009, %v1888
    %v1965 = vsel %vm745, %v1010, %v1890
    %v1966 = vsel %vm745, %v1011, %v1892
    %v1967 = vsel %vm745, %v1012, %v1894
    %v1968 = vsel %vm745, %v1013, %v1896
    %vm1969 = vcmask 523264
    %v1970 = vsel %vm1969, %v1961, %v1906
    %v1971 = vsel %vm1969, %v1962, %v1908
    %v1972 = vsel %vm1969, %v1963, %v1910
    %v1973 = vsel %vm1969, %v1964, %v1912
    %v1974 = vsel %vm1969, %v1965, %v1914
    %v1975 = vsel %vm1969, %v1966, %v1916
    %v1976 = vsel %vm1969, %v1967, %v1918
    %v1977 = vsel %vm1969, %v1968, %v1920
    %vm1978 = vcmask 785408
    %v1979 = vsel %vm1978, %v1970, %v1938
    %v1980 = vsel %vm1978, %v1971, %v1940
    %v1981 = vsel %vm1978, %v1972, %v1942
    %v1982 = vsel %vm1978, %v1973, %v1944
    %v1983 = vsel %vm1978, %v1974, %v1946
    %v1984 = vsel %vm1978, %v1975, %v1948
    %v1985 = vsel %vm1978, %v1976, %v1950
    %v1986 = vsel %vm1978, %v1977, %v1952
    %1987 = vst [vmem:[#allocation3] sm:$0xff] %v1979
    %1988 = vst [vmem:[#allocation3 + $0x10] sm:$0xff] %v1980
    %1989 = vst [vmem:[#allocation3 + $0x20] sm:$0xff] %v1981
    %1990 = vst [vmem:[#allocation3 + $0x30] sm:$0xff] %v1982
    %1991 = vst [vmem:[#allocation3 + $0x40] sm:$0xff] %v1983
    %1992 = vst [vmem:[#allocation3 + $0x50] sm:$0xff] %v1984
    %1993 = vst [vmem:[#allocation3 + $0x60] sm:$0xff] %v1985
    %1994 = vst [vmem:[#allocation3 + $0x70] sm:$0xff] %v1986
    %v1995 = vld [vmem:[#allocation2 + $0x100] sm:$0xff]
    %v1996 = vld [vmem:[#allocation2 + $0x108] sm:$0xff]
    %v1997 = vld [vmem:[#allocation2 + $0x110] sm:$0xff]
    %v1998 = vld [vmem:[#allocation2 + $0x118] sm:$0xff]
    %v1999 = vld [vmem:[#allocation2 + $0x120] sm:$0xff]
    %v2000 = vld [vmem:[#allocation2 + $0x128] sm:$0xff]
    %v2001 = vld [vmem:[#allocation2 + $0x130] sm:$0xff]
    %v2002 = vld [vmem:[#allocation2 + $0x138] sm:$0xff]
    %v2003 = vsel %vm745, %v1873, 0
    %v2005 = vsel %vm745, %v1874, 0
    %v2007 = vsel %vm745, %v1875, 0
    %v2009 = vsel %vm745, %v1876, 0
    %v2011 = vsel %vm745, %v1877, 0
    %v2013 = vsel %vm745, %v1878, 0
    %v2015 = vsel %vm745, %v1879, 0
    %v2017 = vsel %vm745, %v1880, 0
    %2019 = vmatprep.subr.mxu0 0.0
    %2020 = vmatpush1.msra.mxu0 %v18
    %2021 = vmatprep.subr.mxu0 0.0
    %2022 = vmatpush1.msra.mxu0 %v19
    %2023 = vmatprep.subr.mxu0 0.0
    %2024 = vmatpush1.msra.mxu0 %v20
    %2025 = vmatprep.subr.mxu0 0.0
    %2026 = vmatpush1.msra.mxu0 %v21
    %2027 = vmatprep.subr.mxu0 0.0
    %2028 = vmatpush1.msra.mxu0 0.0
    %2029 = vmatprep.subr.mxu0 0.0
    %2030 = vmatpush1.msra.mxu0 0.0
    %2031 = vmatprep.subr.mxu0 0.0
    %2032 = vmatpush1.msra.mxu0 0.0
    %2033 = vmatprep.subr.mxu0 0.0
    %2034 = vmatpush1.msra.mxu0 0.0
    %2035 = vmatprep.subr.mxu0 0.0
    %2036 = vmatpush1.msra.mxu0 0.0
    %2037 = vmatprep.subr.mxu0 0.0
    %2038 = vmatpush1.msra.mxu0 0.0
    %2039 = vmatprep.subr.mxu0 0.0
    %2040 = vmatpush1.msra.mxu0 0.0
    %2041 = vmatprep.subr.mxu0 0.0
    %2042 = vmatpush1.msra.mxu0 0.0
    %2043 = vmatprep.subr.mxu0 0.0
    %2044 = vmatpush1.msra.mxu0 0.0
    %2045 = vmatprep.subr.mxu0 0.0
    %2046 = vmatpush1.msra.mxu0 0.0
    %2047 = vmatprep.subr.mxu0 0.0
    %2048 = vmatpush1.msra.mxu0 0.0
    %2049 = vmatprep.subr.mxu0 0.0
    %2050 = vmatpush1.msra.mxu0 0.0
    %2051 = vmatprep.subr.mxu0 0.0
    %2052 = vmatpush1.msra.mxu0 0.0
    %2053 = vmatprep.subr.mxu0 0.0
    %2054 = vmatpush1.msra.mxu0 0.0
    %2055 = vmatprep.subr.mxu0 0.0
    %2056 = vmatpush1.msra.mxu0 0.0
    %2057 = vmatprep.subr.mxu0 0.0
    %2058 = vmatpush1.msra.mxu0 0.0
    %2059 = vmatprep.subr.mxu0 0.0
    %2060 = vmatpush1.msra.mxu0 0.0
    %2061 = vmatprep.subr.mxu0 0.0
    %2062 = vmatpush1.msra.mxu0 0.0
    %2063 = vmatprep.subr.mxu0 0.0
    %2064 = vmatpush1.msra.mxu0 0.0
    %2065 = vmatprep.subr.mxu0 0.0
    %2066 = vmatpush1.msra.mxu0 0.0
    %2067 = vmatprep.subr.mxu0 0.0
    %2068 = vmatpush1.msra.mxu0 0.0
    %2069 = vmatprep.subr.mxu0 0.0
    %2070 = vmatpush1.msra.mxu0 0.0
    %2071 = vmatprep.subr.mxu0 0.0
    %2072 = vmatpush1.msra.mxu0 0.0
    %2073 = vmatprep.subr.mxu0 0.0
    %2074 = vmatpush1.msra.mxu0 0.0
    %2075 = vmatprep.subr.mxu0 0.0
    %2076 = vmatpush1.msra.mxu0 0.0
    %2077 = vmatprep.subr.mxu0 0.0
    %2078 = vmatpush1.msra.mxu0 0.0
    %2079 = vmatprep.subr.mxu0 0.0
    %2080 = vmatpush1.msra.mxu0 0.0
    %2081 = vmatprep.subr.mxu0 0.0
    %2082 = vmatpush1.msra.mxu0 0.0
    %2083 = vmatprep.mubr.f32.mxu0 0.0
    %2084 = vmatmul.mubr.f32.gmra.mrb[0].mxu0 %v2003
    %v2085 = vpop.f32.mrb[0].mxu0
    %v2086 = vadd.f32 0.0, %v2085
    %v2087 = vpop.f32.mrb[0].mxu0
    %2088 = vmatprep.mubr.f32.mxu0 0.0
    %2089 = vmatmul.mubr.f32.gmra.mrb[0].mxu0 %v2005
    %v2090 = vpop.f32.mrb[0].mxu0
    %v2091 = vadd.f32 0.0, %v2090
    %v2092 = vpop.f32.mrb[0].mxu0
    %2093 = vmatprep.mubr.f32.mxu0 0.0
    %2094 = vmatmul.mubr.f32.gmra.mrb[0].mxu0 %v2007
    %v2095 = vpop.f32.mrb[0].mxu0
    %v2096 = vadd.f32 0.0, %v2095
    %v2097 = vpop.f32.mrb[0].mxu0
    %2098 = vmatprep.mubr.f32.mxu0 0.0
    %2099 = vmatmul.mubr.f32.gmra.mrb[0].mxu0 %v2009
    %v2100 = vpop.f32.mrb[0].mxu0
    %v2101 = vadd.f32 0.0, %v2100
    %v2102 = vpop.f32.mrb[0].mxu0
    %2103 = vmatprep.mubr.f32.mxu0 0.0
    %2104 = vmatmul.mubr.f32.gmra.mrb[0].mxu0 %v2011
    %v2105 = vpop.f32.mrb[0].mxu0
    %v2106 = vadd.f32 0.0, %v2105
    %v2107 = vpop.f32.mrb[0].mxu0
    %2108 = vmatprep.mubr.f32.mxu0 0.0
    %2109 = vmatmul.mubr.f32.gmra.mrb[0].mxu0 %v2013
    %v2110 = vpop.f32.mrb[0].mxu0
    %v2111 = vadd.f32 0.0, %v2110
    %v2112 = vpop.f32.mrb[0].mxu0
    %2113 = vmatprep.mubr.f32.mxu0 0.0
    %2114 = vmatmul.mubr.f32.gmra.mrb[0].mxu0 %v2015
    %v2115 = vpop.f32.mrb[0].mxu0
    %v2116 = vadd.f32 0.0, %v2115
    %v2117 = vpop.f32.mrb[0].mxu0
    %2118 = vmatprep.mubr.f32.mxu0 0.0
    %2119 = vmatmul.mubr.f32.gmra.mrb[0].mxu0 %v2017
    %v2120 = vpop.f32.mrb[0].mxu0
    %v2121 = vadd.f32 0.0, %v2120
    %v2122 = vpop.f32.mrb[0].mxu0
    %2123 = vdwg.mxu0
    %v2124 = vadd.f32 %v1995, %v2086
    %v2125 = vadd.f32 %v1996, %v2091
    %v2126 = vadd.f32 %v1997, %v2096
    %v2127 = vadd.f32 %v1998, %v2101
    %v2128 = vadd.f32 %v1999, %v2106
    %v2129 = vadd.f32 %v2000, %v2111
    %v2130 = vadd.f32 %v2001, %v2116
    %v2131 = vadd.f32 %v2002, %v2121
    %v2132 = vtanh.pop %v2124
    %v2133 = vtanh.pop %v2125
    %v2134 = vtanh.pop %v2126
    %v2135 = vtanh.pop %v2127
    %v2136 = vtanh.pop %v2128
    %v2137 = vtanh.pop %v2129
    %v2138 = vtanh.pop %v2130
    %v2139 = vtanh.pop %v2131
    %v2140 = vmul.f32 %v2132, 0.5
    %v2141 = vmul.f32 %v2133, 0.5
    %v2142 = vmul.f32 %v2134, 0.5
    %v2143 = vmul.f32 %v2135, 0.5
    %v2144 = vmul.f32 %v2136, 0.5
    %v2145 = vmul.f32 %v2137, 0.5
    %v2146 = vmul.f32 %v2138, 0.5
    %v2147 = vmul.f32 %v2139, 0.5
    %v2148 = vadd.f32 %v2140, 0.5
    %v2149 = vadd.f32 %v2141, 0.5
    %v2150 = vadd.f32 %v2142, 0.5
    %v2151 = vadd.f32 %v2143, 0.5
    %v2152 = vadd.f32 %v2144, 0.5
    %v2153 = vadd.f32 %v2145, 0.5
    %v2154 = vadd.f32 %v2146, 0.5
    %v2155 = vadd.f32 %v2147, 0.5
    %2164 = vrot.lane.b32.xlu0 %v2148, 96
    %v2165 = vpop.permute.xlu0 %2164
    %2166 = vrot.lane.b32.xlu0 %v2149, 96
    %v2167 = vpop.permute.xlu0 %2166
    %2168 = vrot.lane.b32.xlu0 %v2150, 96
    %v2169 = vpop.permute.xlu0 %2168
    %2170 = vrot.lane.b32.xlu0 %v2151, 96
    %v2171 = vpop.permute.xlu0 %2170
    %2172 = vrot.lane.b32.xlu0 %v2152, 96
    %v2173 = vpop.permute.xlu0 %2172
    %2174 = vrot.lane.b32.xlu0 %v2153, 96
    %v2175 = vpop.permute.xlu0 %2174
    %2176 = vrot.lane.b32.xlu0 %v2154, 96
    %v2177 = vpop.permute.xlu0 %2176
    %2178 = vrot.lane.b32.xlu0 %v2155, 96
    %v2179 = vpop.permute.xlu0 %2178
    %v2188 = vmul.f32 %v2132, %v2165
    %v2189 = vmul.f32 %v2133, %v2167
    %v2190 = vmul.f32 %v2134, %v2169
    %v2191 = vmul.f32 %v2135, %v2171
    %v2192 = vmul.f32 %v2136, %v2173
    %v2193 = vmul.f32 %v2137, %v2175
    %v2194 = vmul.f32 %v2138, %v2177
    %v2195 = vmul.f32 %v2139, %v2179
    %2196 = vrot.lane.b32.xlu0 %v2148, 64
    %v2197 = vpop.permute.xlu0 %2196
    %2198 = vrot.lane.b32.xlu0 %v2149, 64
    %v2199 = vpop.permute.xlu0 %2198
    %2200 = vrot.lane.b32.xlu0 %v2150, 64
    %v2201 = vpop.permute.xlu0 %2200
    %2202 = vrot.lane.b32.xlu0 %v2151, 64
    %v2203 = vpop.permute.xlu0 %2202
    %2204 = vrot.lane.b32.xlu0 %v2152, 64
    %v2205 = vpop.permute.xlu0 %2204
    %2206 = vrot.lane.b32.xlu0 %v2153, 64
    %v2207 = vpop.permute.xlu0 %2206
    %2208 = vrot.lane.b32.xlu0 %v2154, 64
    %v2209 = vpop.permute.xlu0 %2208
    %2210 = vrot.lane.b32.xlu0 %v2155, 64
    %v2211 = vpop.permute.xlu0 %2210
    %v2220 = vmul.f32 %v1833, %v2197
    %v2221 = vmul.f32 %v1834, %v2199
    %v2222 = vmul.f32 %v1835, %v2201
    %v2223 = vmul.f32 %v1836, %v2203
    %v2224 = vmul.f32 %v1837, %v2205
    %v2225 = vmul.f32 %v1838, %v2207
    %v2226 = vmul.f32 %v1839, %v2209
    %v2227 = vmul.f32 %v1840, %v2211
    %v2228 = vadd.f32 %v2188, %v2220
    %v2229 = vadd.f32 %v2189, %v2221
    %v2230 = vadd.f32 %v2190, %v2222
    %v2231 = vadd.f32 %v2191, %v2223
    %v2232 = vadd.f32 %v2192, %v2224
    %v2233 = vadd.f32 %v2193, %v2225
    %v2234 = vadd.f32 %v2194, %v2226
    %v2235 = vadd.f32 %v2195, %v2227
    %v2236 = vtanh.pop %v2228
    %v2237 = vtanh.pop %v2229
    %v2238 = vtanh.pop %v2230
    %v2239 = vtanh.pop %v2231
    %v2240 = vtanh.pop %v2232
    %v2241 = vtanh.pop %v2233
    %v2242 = vtanh.pop %v2234
    %v2243 = vtanh.pop %v2235
    %2244 = vrot.lane.b32.xlu0 %v2148, 32
    %v2245 = vpop.permute.xlu0 %2244
    %2246 = vrot.lane.b32.xlu0 %v2149, 32
    %v2247 = vpop.permute.xlu0 %2246
    %2248 = vrot.lane.b32.xlu0 %v2150, 32
    %v2249 = vpop.permute.xlu0 %2248
    %2250 = vrot.lane.b32.xlu0 %v2151, 32
    %v2251 = vpop.permute.xlu0 %2250
    %2252 = vrot.lane.b32.xlu0 %v2152, 32
    %v2253 = vpop.permute.xlu0 %2252
    %2254 = vrot.lane.b32.xlu0 %v2153, 32
    %v2255 = vpop.permute.xlu0 %2254
    %2256 = vrot.lane.b32.xlu0 %v2154, 32
    %v2257 = vpop.permute.xlu0 %2256
    %2258 = vrot.lane.b32.xlu0 %v2155, 32
    %v2259 = vpop.permute.xlu0 %2258
    %v2268 = vmul.f32 %v2236, %v2245
    %v2269 = vmul.f32 %v2237, %v2247
    %v2270 = vmul.f32 %v2238, %v2249
    %v2271 = vmul.f32 %v2239, %v2251
    %v2272 = vmul.f32 %v2240, %v2253
    %v2273 = vmul.f32 %v2241, %v2255
    %v2274 = vmul.f32 %v2242, %v2257
    %v2275 = vmul.f32 %v2243, %v2259
    %v2276 = vld [vmem:[#allocation2 + $0x140] sm:$0xff]
    %v2277 = vld [vmem:[#allocation2 + $0x148] sm:$0xff]
    %v2278 = vld [vmem:[#allocation2 + $0x150] sm:$0xff]
    %v2279 = vld [vmem:[#allocation2 + $0x158] sm:$0xff]
    %v2280 = vld [vmem:[#allocation2 + $0x160] sm:$0xff]
    %v2281 = vld [vmem:[#allocation2 + $0x168] sm:$0xff]
    %v2282 = vld [vmem:[#allocation2 + $0x170] sm:$0xff]
    %v2283 = vld [vmem:[#allocation2 + $0x178] sm:$0xff]
    %v2285 = vsel %vm745, %v2268, 0
    %v2288 = vsel %vm745, %v2269, 0
    %v2291 = vsel %vm745, %v2270, 0
    %v2294 = vsel %vm745, %v2271, 0
    %v2297 = vsel %vm745, %v2272, 0
    %v2300 = vsel %vm745, %v2273, 0
    %v2303 = vsel %vm745, %v2274, 0
    %v2306 = vsel %vm745, %v2275, 0
    %2308 = vmatprep.subr.mxu0 0.0
    %2309 = vmatpush1.msra.mxu0 %v18
    %2310 = vmatprep.subr.mxu0 0.0
    %2311 = vmatpush1.msra.mxu0 %v19
    %2312 = vmatprep.subr.mxu0 0.0
    %2313 = vmatpush1.msra.mxu0 %v20
    %2314 = vmatprep.subr.mxu0 0.0
    %2315 = vmatpush1.msra.mxu0 %v21
    %2316 = vmatprep.subr.mxu0 0.0
    %2317 = vmatpush1.msra.mxu0 0.0
    %2318 = vmatprep.subr.mxu0 0.0
    %2319 = vmatpush1.msra.mxu0 0.0
    %2320 = vmatprep.subr.mxu0 0.0
    %2321 = vmatpush1.msra.mxu0 0.0
    %2322 = vmatprep.subr.mxu0 0.0
    %2323 = vmatpush1.msra.mxu0 0.0
    %2324 = vmatprep.subr.mxu0 0.0
    %2325 = vmatpush1.msra.mxu0 0.0
    %2326 = vmatprep.subr.mxu0 0.0
    %2327 = vmatpush1.msra.mxu0 0.0
    %2328 = vmatprep.subr.mxu0 0.0
    %2329 = vmatpush1.msra.mxu0 0.0
    %2330 = vmatprep.subr.mxu0 0.0
    %2331 = vmatpush1.msra.mxu0 0.0
    %2332 = vmatprep.subr.mxu0 0.0
    %2333 = vmatpush1.msra.mxu0 0.0
    %2334 = vmatprep.subr.mxu0 0.0
    %2335 = vmatpush1.msra.mxu0 0.0
    %2336 = vmatprep.subr.mxu0 0.0
    %2337 = vmatpush1.msra.mxu0 0.0
    %2338 = vmatprep.subr.mxu0 0.0
    %2339 = vmatpush1.msra.mxu0 0.0
    %2340 = vmatprep.subr.mxu0 0.0
    %2341 = vmatpush1.msra.mxu0 0.0
    %2342 = vmatprep.subr.mxu0 0.0
    %2343 = vmatpush1.msra.mxu0 0.0
    %2344 = vmatprep.subr.mxu0 0.0
    %2345 = vmatpush1.msra.mxu0 0.0
    %2346 = vmatprep.subr.mxu0 0.0
    %2347 = vmatpush1.msra.mxu0 0.0
    %2348 = vmatprep.subr.mxu0 0.0
    %2349 = vmatpush1.msra.mxu0 0.0
    %2350 = vmatprep.subr.mxu0 0.0
    %2351 = vmatpush1.msra.mxu0 0.0
    %2352 = vmatprep.subr.mxu0 0.0
    %2353 = vmatpush1.msra.mxu0 0.0
    %2354 = vmatprep.subr.mxu0 0.0
    %2355 = vmatpush1.msra.mxu0 0.0
    %2356 = vmatprep.subr.mxu0 0.0
    %2357 = vmatpush1.msra.mxu0 0.0
    %2358 = vmatprep.subr.mxu0 0.0
    %2359 = vmatpush1.msra.mxu0 0.0
    %2360 = vmatprep.subr.mxu0 0.0
    %2361 = vmatpush1.msra.mxu0 0.0
    %2362 = vmatprep.subr.mxu0 0.0
    %2363 = vmatpush1.msra.mxu0 0.0
    %2364 = vmatprep.subr.mxu0 0.0
    %2365 = vmatpush1.msra.mxu0 0.0
    %2366 = vmatprep.subr.mxu0 0.0
    %2367 = vmatpush1.msra.mxu0 0.0
    %2368 = vmatprep.subr.mxu0 0.0
    %2369 = vmatpush1.msra.mxu0 0.0
    %2370 = vmatprep.subr.mxu0 0.0
    %2371 = vmatpush1.msra.mxu0 0.0
    %2372 = vmatprep.mubr.f32.mxu0 0.0
    %2373 = vmatmul.mubr.f32.gmra.mrb[0].mxu0 %v2285
    %v2374 = vpop.f32.mrb[0].mxu0
    %v2375 = vadd.f32 0.0, %v2374
    %v2376 = vpop.f32.mrb[0].mxu0
    %2377 = vmatprep.mubr.f32.mxu0 0.0
    %2378 = vmatmul.mubr.f32.gmra.mrb[0].mxu0 %v2288
    %v2379 = vpop.f32.mrb[0].mxu0
    %v2380 = vadd.f32 0.0, %v2379
    %v2381 = vpop.f32.mrb[0].mxu0
    %2382 = vmatprep.mubr.f32.mxu0 0.0
    %2383 = vmatmul.mubr.f32.gmra.mrb[0].mxu0 %v2291
    %v2384 = vpop.f32.mrb[0].mxu0
    %v2385 = vadd.f32 0.0, %v2384
    %v2386 = vpop.f32.mrb[0].mxu0
    %2387 = vmatprep.mubr.f32.mxu0 0.0
    %2388 = vmatmul.mubr.f32.gmra.mrb[0].mxu0 %v2294
    %v2389 = vpop.f32.mrb[0].mxu0
    %v2390 = vadd.f32 0.0, %v2389
    %v2391 = vpop.f32.mrb[0].mxu0
    %2392 = vmatprep.mubr.f32.mxu0 0.0
    %2393 = vmatmul.mubr.f32.gmra.mrb[0].mxu0 %v2297
    %v2394 = vpop.f32.mrb[0].mxu0
    %v2395 = vadd.f32 0.0, %v2394
    %v2396 = vpop.f32.mrb[0].mxu0
    %2397 = vmatprep.mubr.f32.mxu0 0.0
    %2398 = vmatmul.mubr.f32.gmra.mrb[0].mxu0 %v2300
    %v2399 = vpop.f32.mrb[0].mxu0
    %v2400 = vadd.f32 0.0, %v2399
    %v2401 = vpop.f32.mrb[0].mxu0
    %2402 = vmatprep.mubr.f32.mxu0 0.0
    %2403 = vmatmul.mubr.f32.gmra.mrb[0].mxu0 %v2303
    %v2404 = vpop.f32.mrb[0].mxu0
    %v2405 = vadd.f32 0.0, %v2404
    %v2406 = vpop.f32.mrb[0].mxu0
    %2407 = vmatprep.mubr.f32.mxu0 0.0
    %2408 = vmatmul.mubr.f32.gmra.mrb[0].mxu0 %v2306
    %v2409 = vpop.f32.mrb[0].mxu0
    %v2410 = vadd.f32 0.0, %v2409
    %v2411 = vpop.f32.mrb[0].mxu0
    %2412 = vdwg.mxu0
    %v2413 = vadd.f32 %v2276, %v2375
    %v2414 = vadd.f32 %v2277, %v2380
    %v2415 = vadd.f32 %v2278, %v2385
    %v2416 = vadd.f32 %v2279, %v2390
    %v2417 = vadd.f32 %v2280, %v2395
    %v2418 = vadd.f32 %v2281, %v2400
    %v2419 = vadd.f32 %v2282, %v2405
    %v2420 = vadd.f32 %v2283, %v2410
    %v2421 = vtanh.pop %v2413
    %v2422 = vtanh.pop %v2414
    %v2423 = vtanh.pop %v2415
    %v2424 = vtanh.pop %v2416
    %v2425 = vtanh.pop %v2417
    %v2426 = vtanh.pop %v2418
    %v2427 = vtanh.pop %v2419
    %v2428 = vtanh.pop %v2420
    %v2429 = vmul.f32 %v2421, 0.5
    %v2430 = vmul.f32 %v2422, 0.5
    %v2431 = vmul.f32 %v2423, 0.5
    %v2432 = vmul.f32 %v2424, 0.5
    %v2433 = vmul.f32 %v2425, 0.5
    %v2434 = vmul.f32 %v2426, 0.5
    %v2435 = vmul.f32 %v2427, 0.5
    %v2436 = vmul.f32 %v2428, 0.5
    %v2437 = vadd.f32 %v2429, 0.5
    %v2438 = vadd.f32 %v2430, 0.5
    %v2439 = vadd.f32 %v2431, 0.5
    %v2440 = vadd.f32 %v2432, 0.5
    %v2441 = vadd.f32 %v2433, 0.5
    %v2442 = vadd.f32 %v2434, 0.5
    %v2443 = vadd.f32 %v2435, 0.5
    %v2444 = vadd.f32 %v2436, 0.5
    %2453 = vrot.lane.b32.xlu0 %v2437, 96
    %v2454 = vpop.permute.xlu0 %2453
    %2455 = vrot.lane.b32.xlu0 %v2438, 96
    %v2456 = vpop.permute.xlu0 %2455
    %2457 = vrot.lane.b32.xlu0 %v2439, 96
    %v2458 = vpop.permute.xlu0 %2457
    %2459 = vrot.lane.b32.xlu0 %v2440, 96
    %v2460 = vpop.permute.xlu0 %2459
    %2461 = vrot.lane.b32.xlu0 %v2441, 96
    %v2462 = vpop.permute.xlu0 %2461
    %2463 = vrot.lane.b32.xlu0 %v2442, 96
    %v2464 = vpop.permute.xlu0 %2463
    %2465 = vrot.lane.b32.xlu0 %v2443, 96
    %v2466 = vpop.permute.xlu0 %2465
    %2467 = vrot.lane.b32.xlu0 %v2444, 96
    %v2468 = vpop.permute.xlu0 %2467
    %v2477 = vmul.f32 %v2421, %v2454
    %v2478 = vmul.f32 %v2422, %v2456
    %v2479 = vmul.f32 %v2423, %v2458
    %v2480 = vmul.f32 %v2424, %v2460
    %v2481 = vmul.f32 %v2425, %v2462
    %v2482 = vmul.f32 %v2426, %v2464
    %v2483 = vmul.f32 %v2427, %v2466
    %v2484 = vmul.f32 %v2428, %v2468
    %2485 = vrot.lane.b32.xlu0 %v2437, 64
    %v2486 = vpop.permute.xlu0 %2485
    %2487 = vrot.lane.b32.xlu0 %v2438, 64
    %v2488 = vpop.permute.xlu0 %2487
    %2489 = vrot.lane.b32.xlu0 %v2439, 64
    %v2490 = vpop.permute.xlu0 %2489
    %2491 = vrot.lane.b32.xlu0 %v2440, 64
    %v2492 = vpop.permute.xlu0 %2491
    %2493 = vrot.lane.b32.xlu0 %v2441, 64
    %v2494 = vpop.permute.xlu0 %2493
    %2495 = vrot.lane.b32.xlu0 %v2442, 64
    %v2496 = vpop.permute.xlu0 %2495
    %2497 = vrot.lane.b32.xlu0 %v2443, 64
    %v2498 = vpop.permute.xlu0 %2497
    %2499 = vrot.lane.b32.xlu0 %v2444, 64
    %v2500 = vpop.permute.xlu0 %2499
    %v2509 = vmul.f32 %v2228, %v2486
    %v2510 = vmul.f32 %v2229, %v2488
    %v2511 = vmul.f32 %v2230, %v2490
    %v2512 = vmul.f32 %v2231, %v2492
    %v2513 = vmul.f32 %v2232, %v2494
    %v2514 = vmul.f32 %v2233, %v2496
    %v2515 = vmul.f32 %v2234, %v2498
    %v2516 = vmul.f32 %v2235, %v2500
    %v2517 = vadd.f32 %v2477, %v2509
    %v2518 = vadd.f32 %v2478, %v2510
    %v2519 = vadd.f32 %v2479, %v2511
    %v2520 = vadd.f32 %v2480, %v2512
    %v2521 = vadd.f32 %v2481, %v2513
    %v2522 = vadd.f32 %v2482, %v2514
    %v2523 = vadd.f32 %v2483, %v2515
    %v2524 = vadd.f32 %v2484, %v2516
    %v2525 = vtanh.pop %v2517
    %v2526 = vtanh.pop %v2518
    %v2527 = vtanh.pop %v2519
    %v2528 = vtanh.pop %v2520
    %v2529 = vtanh.pop %v2521
    %v2530 = vtanh.pop %v2522
    %v2531 = vtanh.pop %v2523
    %v2532 = vtanh.pop %v2524
    %2533 = vrot.lane.b32.xlu0 %v2437, 32
    %v2534 = vpop.permute.xlu0 %2533
    %2535 = vrot.lane.b32.xlu0 %v2438, 32
    %v2536 = vpop.permute.xlu0 %2535
    %2537 = vrot.lane.b32.xlu0 %v2439, 32
    %v2538 = vpop.permute.xlu0 %2537
    %2539 = vrot.lane.b32.xlu0 %v2440, 32
    %v2540 = vpop.permute.xlu0 %2539
    %2541 = vrot.lane.b32.xlu0 %v2441, 32
    %v2542 = vpop.permute.xlu0 %2541
    %2543 = vrot.lane.b32.xlu0 %v2442, 32
    %v2544 = vpop.permute.xlu0 %2543
    %2545 = vrot.lane.b32.xlu0 %v2443, 32
    %v2546 = vpop.permute.xlu0 %2545
    %2547 = vrot.lane.b32.xlu0 %v2444, 32
    %v2548 = vpop.permute.xlu0 %2547
    %v2557 = vmul.f32 %v2525, %v2534
    %v2558 = vmul.f32 %v2526, %v2536
    %v2559 = vmul.f32 %v2527, %v2538
    %v2560 = vmul.f32 %v2528, %v2540
    %v2561 = vmul.f32 %v2529, %v2542
    %v2562 = vmul.f32 %v2530, %v2544
    %v2563 = vmul.f32 %v2531, %v2546
    %v2564 = vmul.f32 %v2532, %v2548
    %v2565 = vld [vmem:[#allocation2 + $0x180] sm:$0xff]
    %v2566 = vld [vmem:[#allocation2 + $0x188] sm:$0xff]
    %v2567 = vld [vmem:[#allocation2 + $0x190] sm:$0xff]
    %v2568 = vld [vmem:[#allocation2 + $0x198] sm:$0xff]
    %v2569 = vld [vmem:[#allocation2 + $0x1a0] sm:$0xff]
    %v2570 = vld [vmem:[#allocation2 + $0x1a8] sm:$0xff]
    %v2571 = vld [vmem:[#allocation2 + $0x1b0] sm:$0xff]
    %v2572 = vld [vmem:[#allocation2 + $0x1b8] sm:$0xff]
    %v2574 = vsel %vm745, %v2557, 0
    %v2577 = vsel %vm745, %v2558, 0
    %v2580 = vsel %vm745, %v2559, 0
    %v2583 = vsel %vm745, %v2560, 0
    %v2586 = vsel %vm745, %v2561, 0
    %v2589 = vsel %vm745, %v2562, 0
    %v2592 = vsel %vm745, %v2563, 0
    %v2595 = vsel %vm745, %v2564, 0
    %2597 = vmatprep.subr.mxu0 0.0
    %2598 = vmatpush1.msra.mxu0 %v18
    %2599 = vmatprep.subr.mxu0 0.0
    %2600 = vmatpush1.msra.mxu0 %v19
    %2601 = vmatprep.subr.mxu0 0.0
    %2602 = vmatpush1.msra.mxu0 %v20
    %2603 = vmatprep.subr.mxu0 0.0
    %2604 = vmatpush1.msra.mxu0 %v21
    %2605 = vmatprep.subr.mxu0 0.0
    %2606 = vmatpush1.msra.mxu0 0.0
    %2607 = vmatprep.subr.mxu0 0.0
    %2608 = vmatpush1.msra.mxu0 0.0
    %2609 = vmatprep.subr.mxu0 0.0
    %2610 = vmatpush1.msra.mxu0 0.0
    %2611 = vmatprep.subr.mxu0 0.0
    %2612 = vmatpush1.msra.mxu0 0.0
    %2613 = vmatprep.subr.mxu0 0.0
    %2614 = vmatpush1.msra.mxu0 0.0
    %2615 = vmatprep.subr.mxu0 0.0
    %2616 = vmatpush1.msra.mxu0 0.0
    %2617 = vmatprep.subr.mxu0 0.0
    %2618 = vmatpush1.msra.mxu0 0.0
    %2619 = vmatprep.subr.mxu0 0.0
    %2620 = vmatpush1.msra.mxu0 0.0
    %2621 = vmatprep.subr.mxu0 0.0
    %2622 = vmatpush1.msra.mxu0 0.0
    %2623 = vmatprep.subr.mxu0 0.0
    %2624 = vmatpush1.msra.mxu0 0.0
    %2625 = vmatprep.subr.mxu0 0.0
    %2626 = vmatpush1.msra.mxu0 0.0
    %2627 = vmatprep.subr.mxu0 0.0
    %2628 = vmatpush1.msra.mxu0 0.0
    %2629 = vmatprep.subr.mxu0 0.0
    %2630 = vmatpush1.msra.mxu0 0.0
    %2631 = vmatprep.subr.mxu0 0.0
    %2632 = vmatpush1.msra.mxu0 0.0
    %2633 = vmatprep.subr.mxu0 0.0
    %2634 = vmatpush1.msra.mxu0 0.0
    %2635 = vmatprep.subr.mxu0 0.0
    %2636 = vmatpush1.msra.mxu0 0.0
    %2637 = vmatprep.subr.mxu0 0.0
    %2638 = vmatpush1.msra.mxu0 0.0
    %2639 = vmatprep.subr.mxu0 0.0
    %2640 = vmatpush1.msra.mxu0 0.0
    %2641 = vmatprep.subr.mxu0 0.0
    %2642 = vmatpush1.msra.mxu0 0.0
    %2643 = vmatprep.subr.mxu0 0.0
    %2644 = vmatpush1.msra.mxu0 0.0
    %2645 = vmatprep.subr.mxu0 0.0
    %2646 = vmatpush1.msra.mxu0 0.0
    %2647 = vmatprep.subr.mxu0 0.0
    %2648 = vmatpush1.msra.mxu0 0.0
    %2649 = vmatprep.subr.mxu0 0.0
    %2650 = vmatpush1.msra.mxu0 0.0
    %2651 = vmatprep.subr.mxu0 0.0
    %2652 = vmatpush1.msra.mxu0 0.0
    %2653 = vmatprep.subr.mxu0 0.0
    %2654 = vmatpush1.msra.mxu0 0.0
    %2655 = vmatprep.subr.mxu0 0.0
    %2656 = vmatpush1.msra.mxu0 0.0
    %2657 = vmatprep.subr.mxu0 0.0
    %2658 = vmatpush1.msra.mxu0 0.0
    %2659 = vmatprep.subr.mxu0 0.0
    %2660 = vmatpush1.msra.mxu0 0.0
    %2661 = vmatprep.mubr.f32.mxu0 0.0
    %2662 = vmatmul.mubr.f32.gmra.mrb[0].mxu0 %v2574
    %v2663 = vpop.f32.mrb[0].mxu0
    %v2664 = vadd.f32 0.0, %v2663
    %v2665 = vpop.f32.mrb[0].mxu0
    %2666 = vmatprep.mubr.f32.mxu0 0.0
    %2667 = vmatmul.mubr.f32.gmra.mrb[0].mxu0 %v2577
    %v2668 = vpop.f32.mrb[0].mxu0
    %v2669 = vadd.f32 0.0, %v2668
    %v2670 = vpop.f32.mrb[0].mxu0
    %2671 = vmatprep.mubr.f32.mxu0 0.0
    %2672 = vmatmul.mubr.f32.gmra.mrb[0].mxu0 %v2580
    %v2673 = vpop.f32.mrb[0].mxu0
    %v2674 = vadd.f32 0.0, %v2673
    %v2675 = vpop.f32.mrb[0].mxu0
    %2676 = vmatprep.mubr.f32.mxu0 0.0
    %2677 = vmatmul.mubr.f32.gmra.mrb[0].mxu0 %v2583
    %v2678 = vpop.f32.mrb[0].mxu0
    %v2679 = vadd.f32 0.0, %v2678
    %v2680 = vpop.f32.mrb[0].mxu0
    %2681 = vmatprep.mubr.f32.mxu0 0.0
    %2682 = vmatmul.mubr.f32.gmra.mrb[0].mxu0 %v2586
    %v2683 = vpop.f32.mrb[0].mxu0
    %v2684 = vadd.f32 0.0, %v2683
    %v2685 = vpop.f32.mrb[0].mxu0
    %2686 = vmatprep.mubr.f32.mxu0 0.0
    %2687 = vmatmul.mubr.f32.gmra.mrb[0].mxu0 %v2589
    %v2688 = vpop.f32.mrb[0].mxu0
    %v2689 = vadd.f32 0.0, %v2688
    %v2690 = vpop.f32.mrb[0].mxu0
    %2691 = vmatprep.mubr.f32.mxu0 0.0
    %2692 = vmatmul.mubr.f32.gmra.mrb[0].mxu0 %v2592
    %v2693 = vpop.f32.mrb[0].mxu0
    %v2694 = vadd.f32 0.0, %v2693
    %v2695 = vpop.f32.mrb[0].mxu0
    %2696 = vmatprep.mubr.f32.mxu0 0.0
    %2697 = vmatmul.mubr.f32.gmra.mrb[0].mxu0 %v2595
    %v2698 = vpop.f32.mrb[0].mxu0
    %v2699 = vadd.f32 0.0, %v2698
    %v2700 = vpop.f32.mrb[0].mxu0
    %2701 = vdwg.mxu0
    %v2702 = vadd.f32 %v2565, %v2664
    %v2703 = vadd.f32 %v2566, %v2669
    %v2704 = vadd.f32 %v2567, %v2674
    %v2705 = vadd.f32 %v2568, %v2679
    %v2706 = vadd.f32 %v2569, %v2684
    %v2707 = vadd.f32 %v2570, %v2689
    %v2708 = vadd.f32 %v2571, %v2694
    %v2709 = vadd.f32 %v2572, %v2699
    %v2710 = vtanh.pop %v2702
    %v2711 = vtanh.pop %v2703
    %v2712 = vtanh.pop %v2704
    %v2713 = vtanh.pop %v2705
    %v2714 = vtanh.pop %v2706
    %v2715 = vtanh.pop %v2707
    %v2716 = vtanh.pop %v2708
    %v2717 = vtanh.pop %v2709
    %v2718 = vmul.f32 %v2710, 0.5
    %v2719 = vmul.f32 %v2711, 0.5
    %v2720 = vmul.f32 %v2712, 0.5
    %v2721 = vmul.f32 %v2713, 0.5
    %v2722 = vmul.f32 %v2714, 0.5
    %v2723 = vmul.f32 %v2715, 0.5
    %v2724 = vmul.f32 %v2716, 0.5
    %v2725 = vmul.f32 %v2717, 0.5
    %v2726 = vadd.f32 %v2718, 0.5
    %v2727 = vadd.f32 %v2719, 0.5
    %v2728 = vadd.f32 %v2720, 0.5
    %v2729 = vadd.f32 %v2721, 0.5
    %v2730 = vadd.f32 %v2722, 0.5
    %v2731 = vadd.f32 %v2723, 0.5
    %v2732 = vadd.f32 %v2724, 0.5
    %v2733 = vadd.f32 %v2725, 0.5
    %2742 = vrot.lane.b32.xlu0 %v2726, 96
    %v2743 = vpop.permute.xlu0 %2742
    %2744 = vrot.lane.b32.xlu0 %v2727, 96
    %v2745 = vpop.permute.xlu0 %2744
    %2746 = vrot.lane.b32.xlu0 %v2728, 96
    %v2747 = vpop.permute.xlu0 %2746
    %2748 = vrot.lane.b32.xlu0 %v2729, 96
    %v2749 = vpop.permute.xlu0 %2748
    %2750 = vrot.lane.b32.xlu0 %v2730, 96
    %v2751 = vpop.permute.xlu0 %2750
    %2752 = vrot.lane.b32.xlu0 %v2731, 96
    %v2753 = vpop.permute.xlu0 %2752
    %2754 = vrot.lane.b32.xlu0 %v2732, 96
    %v2755 = vpop.permute.xlu0 %2754
    %2756 = vrot.lane.b32.xlu0 %v2733, 96
    %v2757 = vpop.permute.xlu0 %2756
    %v2766 = vmul.f32 %v2710, %v2743
    %v2767 = vmul.f32 %v2711, %v2745
    %v2768 = vmul.f32 %v2712, %v2747
    %v2769 = vmul.f32 %v2713, %v2749
    %v2770 = vmul.f32 %v2714, %v2751
    %v2771 = vmul.f32 %v2715, %v2753
    %v2772 = vmul.f32 %v2716, %v2755
    %v2773 = vmul.f32 %v2717, %v2757
    %2774 = vrot.lane.b32.xlu0 %v2726, 64
    %v2775 = vpop.permute.xlu0 %2774
    %2776 = vrot.lane.b32.xlu0 %v2727, 64
    %v2777 = vpop.permute.xlu0 %2776
    %2778 = vrot.lane.b32.xlu0 %v2728, 64
    %v2779 = vpop.permute.xlu0 %2778
    %2780 = vrot.lane.b32.xlu0 %v2729, 64
    %v2781 = vpop.permute.xlu0 %2780
    %2782 = vrot.lane.b32.xlu0 %v2730, 64
    %v2783 = vpop.permute.xlu0 %2782
    %2784 = vrot.lane.b32.xlu0 %v2731, 64
    %v2785 = vpop.permute.xlu0 %2784
    %2786 = vrot.lane.b32.xlu0 %v2732, 64
    %v2787 = vpop.permute.xlu0 %2786
    %2788 = vrot.lane.b32.xlu0 %v2733, 64
    %v2789 = vpop.permute.xlu0 %2788
    %v2798 = vmul.f32 %v2517, %v2775
    %v2799 = vmul.f32 %v2518, %v2777
    %v2800 = vmul.f32 %v2519, %v2779
    %v2801 = vmul.f32 %v2520, %v2781
    %v2802 = vmul.f32 %v2521, %v2783
    %v2803 = vmul.f32 %v2522, %v2785
    %v2804 = vmul.f32 %v2523, %v2787
    %v2805 = vmul.f32 %v2524, %v2789
    %v2806 = vadd.f32 %v2766, %v2798
    %v2807 = vadd.f32 %v2767, %v2799
    %v2808 = vadd.f32 %v2768, %v2800
    %v2809 = vadd.f32 %v2769, %v2801
    %v2810 = vadd.f32 %v2770, %v2802
    %v2811 = vadd.f32 %v2771, %v2803
    %v2812 = vadd.f32 %v2772, %v2804
    %v2813 = vadd.f32 %v2773, %v2805
    %v2814 = vtanh.pop %v2806
    %v2815 = vtanh.pop %v2807
    %v2816 = vtanh.pop %v2808
    %v2817 = vtanh.pop %v2809
    %v2818 = vtanh.pop %v2810
    %v2819 = vtanh.pop %v2811
    %v2820 = vtanh.pop %v2812
    %v2821 = vtanh.pop %v2813
    %2822 = vrot.lane.b32.xlu0 %v2726, 32
    %v2823 = vpop.permute.xlu0 %2822
    %2824 = vrot.lane.b32.xlu0 %v2727, 32
    %v2825 = vpop.permute.xlu0 %2824
    %2826 = vrot.lane.b32.xlu0 %v2728, 32
    %v2827 = vpop.permute.xlu0 %2826
    %2828 = vrot.lane.b32.xlu0 %v2729, 32
    %v2829 = vpop.permute.xlu0 %2828
    %2830 = vrot.lane.b32.xlu0 %v2730, 32
    %v2831 = vpop.permute.xlu0 %2830
    %2832 = vrot.lane.b32.xlu0 %v2731, 32
    %v2833 = vpop.permute.xlu0 %2832
    %2834 = vrot.lane.b32.xlu0 %v2732, 32
    %v2835 = vpop.permute.xlu0 %2834
    %2836 = vrot.lane.b32.xlu0 %v2733, 32
    %v2837 = vpop.permute.xlu0 %2836
    %v2846 = vmul.f32 %v2814, %v2823
    %v2847 = vmul.f32 %v2815, %v2825
    %v2848 = vmul.f32 %v2816, %v2827
    %v2849 = vmul.f32 %v2817, %v2829
    %v2850 = vmul.f32 %v2818, %v2831
    %v2851 = vmul.f32 %v2819, %v2833
    %v2852 = vmul.f32 %v2820, %v2835
    %v2853 = vmul.f32 %v2821, %v2837
    %v2854 = vld [vmem:[#allocation2 + $0x1c0] sm:$0xff]
    %v2855 = vld [vmem:[#allocation2 + $0x1c8] sm:$0xff]
    %v2856 = vld [vmem:[#allocation2 + $0x1d0] sm:$0xff]
    %v2857 = vld [vmem:[#allocation2 + $0x1d8] sm:$0xff]
    %v2858 = vld [vmem:[#allocation2 + $0x1e0] sm:$0xff]
    %v2859 = vld [vmem:[#allocation2 + $0x1e8] sm:$0xff]
    %v2860 = vld [vmem:[#allocation2 + $0x1f0] sm:$0xff]
    %v2861 = vld [vmem:[#allocation2 + $0x1f8] sm:$0xff]
    %v2863 = vsel %vm745, %v2846, 0
    %v2866 = vsel %vm745, %v2847, 0
    %v2869 = vsel %vm745, %v2848, 0
    %v2872 = vsel %vm745, %v2849, 0
    %v2875 = vsel %vm745, %v2850, 0
    %v2878 = vsel %vm745, %v2851, 0
    %v2881 = vsel %vm745, %v2852, 0
    %v2884 = vsel %vm745, %v2853, 0
    %2886 = vmatprep.subr.mxu0 0.0
    %2887 = vmatpush1.msra.mxu0 %v18
    %2888 = vmatprep.subr.mxu0 0.0
    %2889 = vmatpush1.msra.mxu0 %v19
    %2890 = vmatprep.subr.mxu0 0.0
    %2891 = vmatpush1.msra.mxu0 %v20
    %2892 = vmatprep.subr.mxu0 0.0
    %2893 = vmatpush1.msra.mxu0 %v21
    %2894 = vmatprep.subr.mxu0 0.0
    %2895 = vmatpush1.msra.mxu0 0.0
    %2896 = vmatprep.subr.mxu0 0.0
    %2897 = vmatpush1.msra.mxu0 0.0
    %2898 = vmatprep.subr.mxu0 0.0
    %2899 = vmatpush1.msra.mxu0 0.0
    %2900 = vmatprep.subr.mxu0 0.0
    %2901 = vmatpush1.msra.mxu0 0.0
    %2902 = vmatprep.subr.mxu0 0.0
    %2903 = vmatpush1.msra.mxu0 0.0
    %2904 = vmatprep.subr.mxu0 0.0
    %2905 = vmatpush1.msra.mxu0 0.0
    %2906 = vmatprep.subr.mxu0 0.0
    %2907 = vmatpush1.msra.mxu0 0.0
    %2908 = vmatprep.subr.mxu0 0.0
    %2909 = vmatpush1.msra.mxu0 0.0
    %2910 = vmatprep.subr.mxu0 0.0
    %2911 = vmatpush1.msra.mxu0 0.0
    %2912 = vmatprep.subr.mxu0 0.0
    %2913 = vmatpush1.msra.mxu0 0.0
    %2914 = vmatprep.subr.mxu0 0.0
    %2915 = vmatpush1.msra.mxu0 0.0
    %2916 = vmatprep.subr.mxu0 0.0
    %2917 = vmatpush1.msra.mxu0 0.0
    %2918 = vmatprep.subr.mxu0 0.0
    %2919 = vmatpush1.msra.mxu0 0.0
    %2920 = vmatprep.subr.mxu0 0.0
    %2921 = vmatpush1.msra.mxu0 0.0
    %2922 = vmatprep.subr.mxu0 0.0
    %2923 = vmatpush1.msra.mxu0 0.0
    %2924 = vmatprep.subr.mxu0 0.0
    %2925 = vmatpush1.msra.mxu0 0.0
    %2926 = vmatprep.subr.mxu0 0.0
    %2927 = vmatpush1.msra.mxu0 0.0
    %2928 = vmatprep.subr.mxu0 0.0
    %2929 = vmatpush1.msra.mxu0 0.0
    %2930 = vmatprep.subr.mxu0 0.0
    %2931 = vmatpush1.msra.mxu0 0.0
    %2932 = vmatprep.subr.mxu0 0.0
    %2933 = vmatpush1.msra.mxu0 0.0
    %2934 = vmatprep.subr.mxu0 0.0
    %2935 = vmatpush1.msra.mxu0 0.0
    %2936 = vmatprep.subr.mxu0 0.0
    %2937 = vmatpush1.msra.mxu0 0.0
    %2938 = vmatprep.subr.mxu0 0.0
    %2939 = vmatpush1.msra.mxu0 0.0
    %2940 = vmatprep.subr.mxu0 0.0
    %2941 = vmatpush1.msra.mxu0 0.0
    %2942 = vmatprep.subr.mxu0 0.0
    %2943 = vmatpush1.msra.mxu0 0.0
    %2944 = vmatprep.subr.mxu0 0.0
    %2945 = vmatpush1.msra.mxu0 0.0
    %2946 = vmatprep.subr.mxu0 0.0
    %2947 = vmatpush1.msra.mxu0 0.0
    %2948 = vmatprep.subr.mxu0 0.0
    %2949 = vmatpush1.msra.mxu0 0.0
    %2950 = vmatprep.mubr.f32.mxu0 0.0
    %2951 = vmatmul.mubr.f32.gmra.mrb[0].mxu0 %v2863
    %v2952 = vpop.f32.mrb[0].mxu0
    %v2953 = vadd.f32 0.0, %v2952
    %v2954 = vpop.f32.mrb[0].mxu0
    %2955 = vmatprep.mubr.f32.mxu0 0.0
    %2956 = vmatmul.mubr.f32.gmra.mrb[0].mxu0 %v2866
    %v2957 = vpop.f32.mrb[0].mxu0
    %v2958 = vadd.f32 0.0, %v2957
    %v2959 = vpop.f32.mrb[0].mxu0
    %2960 = vmatprep.mubr.f32.mxu0 0.0
    %2961 = vmatmul.mubr.f32.gmra.mrb[0].mxu0 %v2869
    %v2962 = vpop.f32.mrb[0].mxu0
    %v2963 = vadd.f32 0.0, %v2962
    %v2964 = vpop.f32.mrb[0].mxu0
    %2965 = vmatprep.mubr.f32.mxu0 0.0
    %2966 = vmatmul.mubr.f32.gmra.mrb[0].mxu0 %v2872
    %v2967 = vpop.f32.mrb[0].mxu0
    %v2968 = vadd.f32 0.0, %v2967
    %v2969 = vpop.f32.mrb[0].mxu0
    %2970 = vmatprep.mubr.f32.mxu0 0.0
    %2971 = vmatmul.mubr.f32.gmra.mrb[0].mxu0 %v2875
    %v2972 = vpop.f32.mrb[0].mxu0
    %v2973 = vadd.f32 0.0, %v2972
    %v2974 = vpop.f32.mrb[0].mxu0
    %2975 = vmatprep.mubr.f32.mxu0 0.0
    %2976 = vmatmul.mubr.f32.gmra.mrb[0].mxu0 %v2878
    %v2977 = vpop.f32.mrb[0].mxu0
    %v2978 = vadd.f32 0.0, %v2977
    %v2979 = vpop.f32.mrb[0].mxu0
    %2980 = vmatprep.mubr.f32.mxu0 0.0
    %2981 = vmatmul.mubr.f32.gmra.mrb[0].mxu0 %v2881
    %v2982 = vpop.f32.mrb[0].mxu0
    %v2983 = vadd.f32 0.0, %v2982
    %v2984 = vpop.f32.mrb[0].mxu0
    %2985 = vmatprep.mubr.f32.mxu0 0.0
    %2986 = vmatmul.mubr.f32.gmra.mrb[0].mxu0 %v2884
    %v2987 = vpop.f32.mrb[0].mxu0
    %v2988 = vadd.f32 0.0, %v2987
    %v2989 = vpop.f32.mrb[0].mxu0
    %2990 = vdwg.mxu0
    %v2991 = vadd.f32 %v2854, %v2953
    %v2992 = vadd.f32 %v2855, %v2958
    %v2993 = vadd.f32 %v2856, %v2963
    %v2994 = vadd.f32 %v2857, %v2968
    %v2995 = vadd.f32 %v2858, %v2973
    %v2996 = vadd.f32 %v2859, %v2978
    %v2997 = vadd.f32 %v2860, %v2983
    %v2998 = vadd.f32 %v2861, %v2988
    %v2999 = vtanh.pop %v2991
    %v3000 = vtanh.pop %v2992
    %v3001 = vtanh.pop %v2993
    %v3002 = vtanh.pop %v2994
    %v3003 = vtanh.pop %v2995
    %v3004 = vtanh.pop %v2996
    %v3005 = vtanh.pop %v2997
    %v3006 = vtanh.pop %v2998
    %v3007 = vmul.f32 %v2999, 0.5
    %v3008 = vmul.f32 %v3000, 0.5
    %v3009 = vmul.f32 %v3001, 0.5
    %v3010 = vmul.f32 %v3002, 0.5
    %v3011 = vmul.f32 %v3003, 0.5
    %v3012 = vmul.f32 %v3004, 0.5
    %v3013 = vmul.f32 %v3005, 0.5
    %v3014 = vmul.f32 %v3006, 0.5
    %v3015 = vadd.f32 %v3007, 0.5
    %v3016 = vadd.f32 %v3008, 0.5
    %v3017 = vadd.f32 %v3009, 0.5
    %v3018 = vadd.f32 %v3010, 0.5
    %v3019 = vadd.f32 %v3011, 0.5
    %v3020 = vadd.f32 %v3012, 0.5
    %v3021 = vadd.f32 %v3013, 0.5
    %v3022 = vadd.f32 %v3014, 0.5
    %3031 = vrot.lane.b32.xlu0 %v3015, 96
    %v3032 = vpop.permute.xlu0 %3031
    %3033 = vrot.lane.b32.xlu0 %v3016, 96
    %v3034 = vpop.permute.xlu0 %3033
    %3035 = vrot.lane.b32.xlu0 %v3017, 96
    %v3036 = vpop.permute.xlu0 %3035
    %3037 = vrot.lane.b32.xlu0 %v3018, 96
    %v3038 = vpop.permute.xlu0 %3037
    %3039 = vrot.lane.b32.xlu0 %v3019, 96
    %v3040 = vpop.permute.xlu0 %3039
    %3041 = vrot.lane.b32.xlu0 %v3020, 96
    %v3042 = vpop.permute.xlu0 %3041
    %3043 = vrot.lane.b32.xlu0 %v3021, 96
    %v3044 = vpop.permute.xlu0 %3043
    %3045 = vrot.lane.b32.xlu0 %v3022, 96
    %v3046 = vpop.permute.xlu0 %3045
    %v3055 = vmul.f32 %v2999, %v3032
    %v3056 = vmul.f32 %v3000, %v3034
    %v3057 = vmul.f32 %v3001, %v3036
    %v3058 = vmul.f32 %v3002, %v3038
    %v3059 = vmul.f32 %v3003, %v3040
    %v3060 = vmul.f32 %v3004, %v3042
    %v3061 = vmul.f32 %v3005, %v3044
    %v3062 = vmul.f32 %v3006, %v3046
    %3063 = vrot.lane.b32.xlu0 %v3015, 64
    %v3064 = vpop.permute.xlu0 %3063
    %3065 = vrot.lane.b32.xlu0 %v3016, 64
    %v3066 = vpop.permute.xlu0 %3065
    %3067 = vrot.lane.b32.xlu0 %v3017, 64
    %v3068 = vpop.permute.xlu0 %3067
    %3069 = vrot.lane.b32.xlu0 %v3018, 64
    %v3070 = vpop.permute.xlu0 %3069
    %3071 = vrot.lane.b32.xlu0 %v3019, 64
    %v3072 = vpop.permute.xlu0 %3071
    %3073 = vrot.lane.b32.xlu0 %v3020, 64
    %v3074 = vpop.permute.xlu0 %3073
    %3075 = vrot.lane.b32.xlu0 %v3021, 64
    %v3076 = vpop.permute.xlu0 %3075
    %3077 = vrot.lane.b32.xlu0 %v3022, 64
    %v3078 = vpop.permute.xlu0 %3077
    %v3087 = vmul.f32 %v2806, %v3064
    %v3088 = vmul.f32 %v2807, %v3066
    %v3089 = vmul.f32 %v2808, %v3068
    %v3090 = vmul.f32 %v2809, %v3070
    %v3091 = vmul.f32 %v2810, %v3072
    %v3092 = vmul.f32 %v2811, %v3074
    %v3093 = vmul.f32 %v2812, %v3076
    %v3094 = vmul.f32 %v2813, %v3078
    %v3095 = vadd.f32 %v3055, %v3087
    %v3096 = vadd.f32 %v3056, %v3088
    %v3097 = vadd.f32 %v3057, %v3089
    %v3098 = vadd.f32 %v3058, %v3090
    %v3099 = vadd.f32 %v3059, %v3091
    %v3100 = vadd.f32 %v3060, %v3092
    %v3101 = vadd.f32 %v3061, %v3093
    %v3102 = vadd.f32 %v3062, %v3094
    %v3103 = vtanh.pop %v3095
    %v3104 = vtanh.pop %v3096
    %v3105 = vtanh.pop %v3097
    %v3106 = vtanh.pop %v3098
    %v3107 = vtanh.pop %v3099
    %v3108 = vtanh.pop %v3100
    %v3109 = vtanh.pop %v3101
    %v3110 = vtanh.pop %v3102
    %3111 = vrot.lane.b32.xlu0 %v3015, 32
    %v3112 = vpop.permute.xlu0 %3111
    %3113 = vrot.lane.b32.xlu0 %v3016, 32
    %v3114 = vpop.permute.xlu0 %3113
    %3115 = vrot.lane.b32.xlu0 %v3017, 32
    %v3116 = vpop.permute.xlu0 %3115
    %3117 = vrot.lane.b32.xlu0 %v3018, 32
    %v3118 = vpop.permute.xlu0 %3117
    %3119 = vrot.lane.b32.xlu0 %v3019, 32
    %v3120 = vpop.permute.xlu0 %3119
    %3121 = vrot.lane.b32.xlu0 %v3020, 32
    %v3122 = vpop.permute.xlu0 %3121
    %3123 = vrot.lane.b32.xlu0 %v3021, 32
    %v3124 = vpop.permute.xlu0 %3123
    %3125 = vrot.lane.b32.xlu0 %v3022, 32
    %v3126 = vpop.permute.xlu0 %3125
    %v3135 = vmul.f32 %v3103, %v3112
    %v3136 = vmul.f32 %v3104, %v3114
    %v3137 = vmul.f32 %v3105, %v3116
    %v3138 = vmul.f32 %v3106, %v3118
    %v3139 = vmul.f32 %v3107, %v3120
    %v3140 = vmul.f32 %v3108, %v3122
    %v3141 = vmul.f32 %v3109, %v3124
    %v3142 = vmul.f32 %v3110, %v3126
    %3143 = vrot.lane.b32.xlu0 %v2557, 32
    %v3144 = vpop.permute.xlu0 %3143
    %3145 = vrot.lane.b32.xlu0 %v2558, 32
    %v3146 = vpop.permute.xlu0 %3145
    %3147 = vrot.lane.b32.xlu0 %v2559, 32
    %v3148 = vpop.permute.xlu0 %3147
    %3149 = vrot.lane.b32.xlu0 %v2560, 32
    %v3150 = vpop.permute.xlu0 %3149
    %3151 = vrot.lane.b32.xlu0 %v2561, 32
    %v3152 = vpop.permute.xlu0 %3151
    %3153 = vrot.lane.b32.xlu0 %v2562, 32
    %v3154 = vpop.permute.xlu0 %3153
    %3155 = vrot.lane.b32.xlu0 %v2563, 32
    %v3156 = vpop.permute.xlu0 %3155
    %3157 = vrot.lane.b32.xlu0 %v2564, 32
    %v3158 = vpop.permute.xlu0 %3157
    %3167 = vrot.lane.b32.xlu0 %v2846, 64
    %v3168 = vpop.permute.xlu0 %3167
    %3169 = vrot.lane.b32.xlu0 %v2847, 64
    %v3170 = vpop.permute.xlu0 %3169
    %3171 = vrot.lane.b32.xlu0 %v2848, 64
    %v3172 = vpop.permute.xlu0 %3171
    %3173 = vrot.lane.b32.xlu0 %v2849, 64
    %v3174 = vpop.permute.xlu0 %3173
    %3175 = vrot.lane.b32.xlu0 %v2850, 64
    %v3176 = vpop.permute.xlu0 %3175
    %3177 = vrot.lane.b32.xlu0 %v2851, 64
    %v3178 = vpop.permute.xlu0 %3177
    %3179 = vrot.lane.b32.xlu0 %v2852, 64
    %v3180 = vpop.permute.xlu0 %3179
    %3181 = vrot.lane.b32.xlu0 %v2853, 64
    %v3182 = vpop.permute.xlu0 %3181
    %3199 = vrot.lane.b32.xlu0 %v3135, 96
    %v3200 = vpop.permute.xlu0 %3199
    %3201 = vrot.lane.b32.xlu0 %v3136, 96
    %v3202 = vpop.permute.xlu0 %3201
    %3203 = vrot.lane.b32.xlu0 %v3137, 96
    %v3204 = vpop.permute.xlu0 %3203
    %3205 = vrot.lane.b32.xlu0 %v3138, 96
    %v3206 = vpop.permute.xlu0 %3205
    %3207 = vrot.lane.b32.xlu0 %v3139, 96
    %v3208 = vpop.permute.xlu0 %3207
    %3209 = vrot.lane.b32.xlu0 %v3140, 96
    %v3210 = vpop.permute.xlu0 %3209
    %3211 = vrot.lane.b32.xlu0 %v3141, 96
    %v3212 = vpop.permute.xlu0 %3211
    %3213 = vrot.lane.b32.xlu0 %v3142, 96
    %v3214 = vpop.permute.xlu0 %3213
    %v3223 = vsel %vm745, %v2268, %v3144
    %v3224 = vsel %vm745, %v2269, %v3146
    %v3225 = vsel %vm745, %v2270, %v3148
    %v3226 = vsel %vm745, %v2271, %v3150
    %v3227 = vsel %vm745, %v2272, %v3152
    %v3228 = vsel %vm745, %v2273, %v3154
    %v3229 = vsel %vm745, %v2274, %v3156
    %v3230 = vsel %vm745, %v2275, %v3158
    %v3231 = vsel %vm1969, %v3223, %v3168
    %v3232 = vsel %vm1969, %v3224, %v3170
    %v3233 = vsel %vm1969, %v3225, %v3172
    %v3234 = vsel %vm1969, %v3226, %v3174
    %v3235 = vsel %vm1969, %v3227, %v3176
    %v3236 = vsel %vm1969, %v3228, %v3178
    %v3237 = vsel %vm1969, %v3229, %v3180
    %v3238 = vsel %vm1969, %v3230, %v3182
    %v3239 = vsel %vm1978, %v3231, %v3200
    %v3240 = vsel %vm1978, %v3232, %v3202
    %v3241 = vsel %vm1978, %v3233, %v3204
    %v3242 = vsel %vm1978, %v3234, %v3206
    %v3243 = vsel %vm1978, %v3235, %v3208
    %v3244 = vsel %vm1978, %v3236, %v3210
    %v3245 = vsel %vm1978, %v3237, %v3212
    %v3246 = vsel %vm1978, %v3238, %v3214
    %3247 = vst [vmem:[#allocation3 + $0x8] sm:$0xff] %v3239
    %3248 = vst [vmem:[#allocation3 + $0x18] sm:$0xff] %v3240
    %3249 = vst [vmem:[#allocation3 + $0x28] sm:$0xff] %v3241
    %3250 = vst [vmem:[#allocation3 + $0x38] sm:$0xff] %v3242
    %3251 = vst [vmem:[#allocation3 + $0x48] sm:$0xff] %v3243
    %3252 = vst [vmem:[#allocation3 + $0x58] sm:$0xff] %v3244
    %3253 = vst [vmem:[#allocation3 + $0x68] sm:$0xff] %v3245
    %3254 = vst [vmem:[#allocation3 + $0x78] sm:$0xff] %v3246
    // Predicated region
    $region18: #{tpu_custom_call.1} parent=1 // pred_check
      _
    $region19: #{tpu_custom_call.1} parent=1 // pred_check_branch
      %3256 = sbr.rel (0) target = $region21
    $region20: #{tpu_custom_call.1} parent=1 // pred_region
      %s3258 = ssub.s32 2048, 2048
      %3259 = vsyncadd [#allocation4], %s3258
      %s3260 = sshll.u32 [#allocation3], 4
      %s3261 = int_to_ptr.vmem [resolvable:$true] %s3260
      %3266 = dma.vmem_to_hbm [thread:$0]  %s3261, 2048, %s4, [#allocation4], 256, 256, 16
    $region21: #{tpu_custom_call.1} parent=1 // pred_fallthru
      _
    // Predicated region
    $region22: #{tpu_custom_call.1} parent=1 // pred_check
      _
    $region23: #{tpu_custom_call.1} parent=1 // pred_check_branch
      %3268 = sbr.rel (0) target = $region25
    $region24: #{tpu_custom_call.1} parent=1 // pred_region
      %3269 = dma.done [#allocation4], 2048
    $region25: #{tpu_custom_call.1} parent=1 // pred_fallthru
      _
    %3270 = vsyncpa [#allocation4], 1

</llo_original>
